<compile_context>
chip_gen: v5e
topology: v5e:2x2
jax: 0.10.0
libtpu: 0.0.40
codegen_flags: <defaults>
</compile_context>

<pallas_src>
import math
import functools

import jax
import jax.numpy as jnp
from jax import lax
from jax.experimental import pallas as pl
from jax.experimental.pallas import tpu as pltpu


# --------------------------------------------------------------------------
# In-kernel helpers
# --------------------------------------------------------------------------
_INV_SQRT2 = 1.0 / math.sqrt(2.0)


def _gelu_erf(x):
    # exact-erf GELU (the module explicitly uses erf, not the tanh approximation).
    # Python-float constants keep the compute dtype of `x` (f32 or bf16).
    return x * 0.5 * (1.0 + lax.erf(x * _INV_SQRT2))


def _layernorm(v, gamma, beta, eps):
    """Matches the torch module: unbiased std (N-1), clamped at eps."""
    mu = jnp.mean(v, axis=-1, keepdims=True)
    n = v.shape[-1]
    var = jnp.sum((v - mu) ** 2, axis=-1, keepdims=True) * (1.0 / (n - 1))
    sigma = jnp.maximum(jnp.sqrt(var), eps)
    # Exact divide: runs once per row tile, cost is negligible; avoids the
    # ~1e-3-level error of pl.reciprocal(approx=True).
    return (v - mu) / sigma * gamma + beta


# --------------------------------------------------------------------------
# Kernel 1: resident weights (no d_ff reduction).  grid = (row_tiles,)
# --------------------------------------------------------------------------
def _pw_resident_kernel(x_ref, w1_ref, b1_ref, w2_ref, b2_ref,
                        gamma_ref, beta_ref, o_ref, *, eps, bf16_gelu):
    x = x_ref[...]                                        # (tq, D) f32, residual
    x_bf = x.astype(jnp.bfloat16)

    # h1 = GELU(x @ W1 + b1)
    h1 = jnp.dot(x_bf, w1_ref[...], preferred_element_type=jnp.float32) + b1_ref[...]
    if bf16_gelu:
        h1 = _gelu_erf(h1.astype(jnp.bfloat16))           # bf16 VPU path (v6e/v7x)
    else:
        h1 = _gelu_erf(h1).astype(jnp.bfloat16)           # f32 VPU path (v5e safe)

    # y = h1 @ W2 + b2 + residual
    y = jnp.dot(h1, w2_ref[...], preferred_element_type=jnp.float32)
    y = y + b2_ref[...] + x

    o_ref[...] = _layernorm(y, gamma_ref[...], beta_ref[...], eps)


# --------------------------------------------------------------------------
# Kernel 2: chunked d_ff reduction (fallback when weights don't fit in VMEM).
# grid = (row_tiles, d_ff_chunks)  -- last axis is the reduction.
# --------------------------------------------------------------------------
def _pw_chunked_kernel(x_ref, w1_ref, b1_ref, w2_ref, b2_ref,
                       gamma_ref, beta_ref, o_ref, x_bf_ref, acc_ref,
                       *, eps, bf16_gelu):
    f = pl.program_id(1)

    @pl.when(f == 0)
    def _init():
        acc_ref[...] = jnp.zeros_like(acc_ref)
        # Hoisted cast: x is resident over f, cast it once.
        x_bf_ref[...] = x_ref[...].astype(jnp.bfloat16)

    h1 = jnp.dot(x_bf_ref[...], w1_ref[...],
                 preferred_element_type=jnp.float32) + b1_ref[...]
    if bf16_gelu:
        h1 = _gelu_erf(h1.astype(jnp.bfloat16))
    else:
        h1 = _gelu_erf(h1).astype(jnp.bfloat16)

    acc_ref[...] += jnp.dot(h1, w2_ref[...], preferred_element_type=jnp.float32)

    @pl.when(f == pl.num_programs(1) - 1)
    def _finalize():
        y = acc_ref[...] + b2_ref[...] + x_ref[...]
        o_ref[...] = _layernorm(y, gamma_ref[...], beta_ref[...], eps)


# --------------------------------------------------------------------------
# Tiling / budgeting helpers
# --------------------------------------------------------------------------
def _vmem_capacity_bytes():
    try:
        return int(pltpu.get_tpu_info().vmem_capacity_bytes)
    except Exception:
        return 64 * 1024 * 1024      # conservative (v7x per-TC physical)


def _pick_row_tile(m, cap):
    """Largest divisor of m that is <= cap and a multiple of 8 (sublane granule).
    Falls back to the full extent m when no such divisor exists (still legal)."""
    cap = max(1, min(cap, m))
    for d in range(cap, 7, -1):
        if m % d == 0 and d % 8 == 0:
            return d
    return m


def _pick_ff_tile(d_ff, cap):
    """Largest divisor of d_ff that is <= cap and a multiple of 128."""
    cap = max(1, min(cap, d_ff))
    for d in range(cap, 127, -1):
        if d_ff % d == 0 and d % 128 == 0:
            return d
    return d_ff


def _resident_footprint(D, d_ff, tq):
    w = 2 * D * d_ff * 2                 # W1 + W2 as bf16, fetched once
    h1 = tq * d_ff * 4                   # f32 intermediate (compiler-managed)
    io = 2 * 2 * tq * D * 4              # x/out tiles, double-buffered
    misc = 4 * d_ff * 4 + 8 * D * 4 + (2 << 20)   # biases, gamma/beta, slack
    return w + h1 + io + misc


# --------------------------------------------------------------------------
# Wrapper
# --------------------------------------------------------------------------
def positionwise(x, params, *, eps=1e-6, target_tq=256, target_tf=512,
                 bf16_gelu=False):
    """Fused PositionWise forward.  x: (B, L, d_model) f32.

    params:
      w1:    (d_model, d_ff)  bf16   (matmul-form of Conv1d(d_model, d_ff, 1).weight^T)
      b1:    (1, d_ff)        f32
      w2:    (d_ff, d_model)  bf16
      b2:    (1, d_model)     f32
      gamma: (1, d_model)     f32
      beta:  (1, d_model)     f32

    bf16_gelu: compute the erf-GELU in bf16 (v6e/v7x have bf16 VPU ALUs; leave
    False on v5e where it only adds pack/unpack).
    """
    B, L, D = x.shape
    d_ff = params["w1"].shape[1]
    assert D % 128 == 0, "pad d_model to a multiple of 128 for lane-dense stores"

    # Flatten batch x seq into one row axis: per-position op, and it maximizes
    # the parallel grid (v7x megacore sharding even at batch=1).
    M = B * L
    x2 = x.reshape(M, D)

    # Generation-aware VMEM budget (~96 MiB on v5e/v6e, ~48 MiB on v7x).
    capacity = _vmem_capacity_bytes()
    budget = int(capacity * 0.75)

    # Row tile: big (amortize ~0.35us/step grid overhead, fill the MXU), but
    # keep >= 2 parallel steps so both v7x TensorCores get work.
    tq = _pick_row_tile(M, target_tq)
    if M // tq < 2:
        tq_half = _pick_row_tile(M, max(M // 2, 8))
        if tq_half < M and M % tq_half == 0:
            tq = tq_half

    # Prefer the resident-weight (no-reduction) structure; shrink tq if needed.
    resident = False
    for cap in (tq, 128, 64, 32, 16, 8):
        cand = _pick_row_tile(M, cap)
        if _resident_footprint(D, d_ff, cand) <= budget:
            tq = cand
            resident = True
            break

    common_compiler_kwargs = dict(vmem_limit_bytes=budget)

    if resident:
        grid = (M // tq,)
        kernel = functools.partial(_pw_resident_kernel, eps=eps, bf16_gelu=bf16_gelu)
        out2 = pl.pallas_call(
            kernel,
            out_shape=jax.ShapeDtypeStruct((M, D), jnp.float32),
            grid_spec=pltpu.PrefetchScalarGridSpec(
                num_scalar_prefetch=0,
                grid=grid,
                in_specs=[
                    pl.BlockSpec((tq, D),    lambda q: (q, 0)),   # x tile (streamed)
                    pl.BlockSpec((D, d_ff),  lambda q: (0, 0)),   # W1 (resident)
                    pl.BlockSpec((1, d_ff),  lambda q: (0, 0)),   # b1 (resident)
                    pl.BlockSpec((d_ff, D),  lambda q: (0, 0)),   # W2 (resident)
                    pl.BlockSpec((1, D),     lambda q: (0, 0)),   # b2
                    pl.BlockSpec((1, D),     lambda q: (0, 0)),   # gamma
                    pl.BlockSpec((1, D),     lambda q: (0, 0)),   # beta
                ],
                out_specs=pl.BlockSpec((tq, D), lambda q: (q, 0)),
                scratch_shapes=[],
            ),
            compiler_params=pltpu.CompilerParams(
                dimension_semantics=("parallel",),
                **common_compiler_kwargs,
            ),
        )(x2, params["w1"], params["b1"], params["w2"], params["b2"],
          params["gamma"], params["beta"])
    else:
        # Chunked fallback: stream W1/W2 in d_ff chunks (reduction axis last),
        # f32 VMEM accumulator, 3-deep buffering on the weight chunks.
        tf = _pick_ff_tile(d_ff, target_tf)
        grid = (M // tq, d_ff // tf)
        kernel = functools.partial(_pw_chunked_kernel, eps=eps, bf16_gelu=bf16_gelu)
        out2 = pl.pallas_call(
            kernel,
            out_shape=jax.ShapeDtypeStruct((M, D), jnp.float32),
            grid_spec=pltpu.PrefetchScalarGridSpec(
                num_scalar_prefetch=0,
                grid=grid,
                in_specs=[
                    pl.BlockSpec((tq, D), lambda q, f: (q, 0)),   # x (resident over f)
                    pl.BlockSpec((D, tf), lambda q, f: (0, f),
                                 pipeline_mode=pl.Buffered(3)),   # W1 chunk
                    pl.BlockSpec((1, tf), lambda q, f: (0, f)),   # b1 chunk
                    pl.BlockSpec((tf, D), lambda q, f: (f, 0),
                                 pipeline_mode=pl.Buffered(3)),   # W2 chunk
                    pl.BlockSpec((1, D),  lambda q, f: (0, 0)),   # b2
                    pl.BlockSpec((1, D),  lambda q, f: (0, 0)),   # gamma
                    pl.BlockSpec((1, D),  lambda q, f: (0, 0)),   # beta
                ],
                out_specs=pl.BlockSpec((tq, D), lambda q, f: (q, 0)),
                scratch_shapes=[
                    pltpu.VMEM((tq, D), jnp.bfloat16),            # hoisted x cast
                    pltpu.VMEM((tq, D), jnp.float32),             # conv2 accumulator
                ],
            ),
            compiler_params=pltpu.CompilerParams(
                dimension_semantics=("parallel", "arbitrary"),
                **common_compiler_kwargs,
            ),
        )(x2, params["w1"], params["b1"], params["w2"], params["b2"],
          params["gamma"], params["beta"])

    return out2.reshape(B, L, D)


# --------------------------------------------------------------------------
# Pure-JAX f32 reference (same math as the torch module) for a sanity check
# --------------------------------------------------------------------------
def positionwise_ref(x, w1_t, b1, w2_t, b2, gamma, beta, eps=1e-6):
    # Conv1d(d_model, d_ff, 1): weight (d_ff, d_model) -> per-position x @ W^T + b
    h1 = jnp.einsum("bld,fd->blf", x, w1_t) + b1
    h1 = h1 * 0.5 * (1.0 + lax.erf(h1 / jnp.float32(math.sqrt(2.0))))
    h2 = jnp.einsum("blf,df->bld", h1, w2_t) + b2
    y = x + h2
    mu = jnp.mean(y, axis=-1, keepdims=True)
    var = jnp.sum((y - mu) ** 2, axis=-1, keepdims=True) / (y.shape[-1] - 1)
    sigma = jnp.maximum(jnp.sqrt(var), eps)
    return (y - mu) / sigma * gamma + beta


# --------------------------------------------------------------------------
if __name__ == "__main__":
    # Small shapes consistent with the module (d_model lane-dense).
    B, L, d_model, d_ff = 2, 16, 128, 512

    key = jax.random.PRNGKey(0)
    ks = jax.random.split(key, 5)
    scale = 0.02

    # torch-layout weights: Conv1d(d_model, d_ff, 1).weight -> (d_ff, d_model)
    w1_t = scale * jax.random.normal(ks[0], (d_ff, d_model), jnp.float32)
    b1 = 0.01 * jax.random.normal(ks[1], (d_ff,), jnp.float32)
    w2_t = scale * jax.random.normal(ks[2], (d_model, d_ff), jnp.float32)
    b2 = 0.01 * jax.random.normal(ks[3], (d_model,), jnp.float32)
    gamma = jnp.ones((d_model,), jnp.float32)
    beta = jnp.zeros((d_model,), jnp.float32)

    x = jax.random.normal(ks[4], (B, L, d_model), jnp.float32)

    params = {
        # matmul-form (transposed) weights, shipped to the kernel as bf16
        "w1": w1_t.T.astype(jnp.bfloat16),        # (d_model, d_ff)
        "b1": b1.reshape(1, d_ff),                # f32
        "w2": w2_t.T.astype(jnp.bfloat16),        # (d_ff, d_model)
        "b2": b2.reshape(1, d_model),             # f32
        "gamma": gamma.reshape(1, d_model),
        "beta": beta.reshape(1, d_model),
    }

    out = positionwise(x, params)
    out = jax.block_until_ready(out)

    ref = positionwise_ref(x, w1_t, b1, w2_t, b2, gamma, beta)
    assert out.shape == (B, L, d_model)
    max_err = float(jnp.max(jnp.abs(out - ref)))
    # bf16 MXU inputs vs full-f32 reference: allow small slack
    assert jnp.allclose(out, ref, atol=5e-3, rtol=5e-3), f"mismatch vs reference: {max_err}"

    print("KERNEL_OK")
</pallas_src>

<mosaic_0001>
module attributes {stable_mosaic.version = 11 : i64} {
  func.func @_pw_resident_kernel(%arg0: i32, %arg1: memref<16x128xf32, #tpu.memory_space<vmem>>, %arg2: memref<128x512xbf16, #tpu.memory_space<vmem>>, %arg3: memref<1x512xf32, #tpu.memory_space<vmem>>, %arg4: memref<512x128xbf16, #tpu.memory_space<vmem>>, %arg5: memref<1x128xf32, #tpu.memory_space<vmem>>, %arg6: memref<1x128xf32, #tpu.memory_space<vmem>>, %arg7: memref<1x128xf32, #tpu.memory_space<vmem>>, %arg8: memref<16x128xf32, #tpu.memory_space<vmem>>) attributes {dimension_semantics = [#tpu.dimension_semantics<parallel>], iteration_bounds = array<i64: 2>, scalar_prefetch = 0 : i64, scratch_operands = 0 : i64, tpu.core_type = #tpu.core_type<tc>, window_params = [{transform_indices = @transform_0, window_bounds = array<i64: 16, 128>}, {pipeline_mode = #tpu.pipeline_mode<synchronous>, transform_indices = @transform_1, window_bounds = array<i64: 128, 512>}, {pipeline_mode = #tpu.pipeline_mode<synchronous>, transform_indices = @transform_2, window_bounds = array<i64: 1, 512>}, {pipeline_mode = #tpu.pipeline_mode<synchronous>, transform_indices = @transform_3, window_bounds = array<i64: 512, 128>}, {pipeline_mode = #tpu.pipeline_mode<synchronous>, transform_indices = @transform_4, window_bounds = array<i64: 1, 128>}, {pipeline_mode = #tpu.pipeline_mode<synchronous>, transform_indices = @transform_5, window_bounds = array<i64: 1, 128>}, {pipeline_mode = #tpu.pipeline_mode<synchronous>, transform_indices = @transform_6, window_bounds = array<i64: 1, 128>}, {transform_indices = @transform_7, window_bounds = array<i64: 16, 128>}]} {
    %c0 = arith.constant 0 : index
    %c0_0 = arith.constant 0 : index
    %0 = vector.load %arg1[%c0, %c0_0] : memref<16x128xf32, #tpu.memory_space<vmem>>, vector<16x128xf32>
    %1 = arith.truncf %0 : vector<16x128xf32> to vector<16x128xbf16>
    %c0_1 = arith.constant 0 : index
    %c0_2 = arith.constant 0 : index
    %2 = vector.load %arg2[%c0_1, %c0_2] : memref<128x512xbf16, #tpu.memory_space<vmem>>, vector<128x512xbf16>
    %cst = arith.constant dense<0.000000e+00> : vector<16x512xf32>
    %3 = tpu.matmul %1, %2, %cst {dimension_numbers = #tpu.dot_dimension_numbers<[1], [0], [0], [1], [0, 0, 1, 1], [], []>} : vector<16x128xbf16>, vector<128x512xbf16>, vector<16x512xf32> -> vector<16x512xf32>
    %c0_3 = arith.constant 0 : index
    %c0_4 = arith.constant 0 : index
    %4 = vector.load %arg3[%c0_3, %c0_4] : memref<1x512xf32, #tpu.memory_space<vmem>>, vector<1x512xf32>
    %5 = vector.broadcast %4 : vector<1x512xf32> to vector<16x512xf32>
    %6 = arith.addf %3, %5 : vector<16x512xf32>
    %cst_5 = arith.constant 5.000000e-01 : f32
    %7 = vector.broadcast %cst_5 : f32 to vector<16x512xf32>
    %8 = arith.mulf %6, %7 : vector<16x512xf32>
    %cst_6 = arith.constant 0.707106769 : f32
    %9 = vector.broadcast %cst_6 : f32 to vector<16x512xf32>
    %10 = arith.mulf %6, %9 : vector<16x512xf32>
    %11 = math.erf %10 : vector<16x512xf32>
    %cst_7 = arith.constant 1.000000e+00 : f32
    %12 = vector.broadcast %cst_7 : f32 to vector<16x512xf32>
    %13 = arith.addf %12, %11 : vector<16x512xf32>
    %14 = arith.mulf %8, %13 : vector<16x512xf32>
    %15 = arith.truncf %14 : vector<16x512xf32> to vector<16x512xbf16>
    %c0_8 = arith.constant 0 : index
    %c0_9 = arith.constant 0 : index
    %16 = vector.load %arg4[%c0_8, %c0_9] : memref<512x128xbf16, #tpu.memory_space<vmem>>, vector<512x128xbf16>
    %cst_10 = arith.constant dense<0.000000e+00> : vector<16x128xf32>
    %17 = tpu.matmul %15, %16, %cst_10 {dimension_numbers = #tpu.dot_dimension_numbers<[1], [0], [0], [1], [0, 0, 1, 1], [], []>} : vector<16x512xbf16>, vector<512x128xbf16>, vector<16x128xf32> -> vector<16x128xf32>
    %c0_11 = arith.constant 0 : index
    %c0_12 = arith.constant 0 : index
    %18 = vector.load %arg5[%c0_11, %c0_12] : memref<1x128xf32, #tpu.memory_space<vmem>>, vector<1x128xf32>
    %19 = vector.broadcast %18 : vector<1x128xf32> to vector<16x128xf32>
    %20 = arith.addf %17, %19 : vector<16x128xf32>
    %21 = arith.addf %20, %0 : vector<16x128xf32>
    %c0_13 = arith.constant 0 : index
    %c0_14 = arith.constant 0 : index
    %22 = vector.load %arg6[%c0_13, %c0_14] : memref<1x128xf32, #tpu.memory_space<vmem>>, vector<1x128xf32>
    %c0_15 = arith.constant 0 : index
    %c0_16 = arith.constant 0 : index
    %23 = vector.load %arg7[%c0_15, %c0_16] : memref<1x128xf32, #tpu.memory_space<vmem>>, vector<1x128xf32>
    %cst_17 = arith.constant dense<0.000000e+00> : vector<16xf32>
    %24 = vector.multi_reduction <add>, %21, %cst_17 [1] : vector<16x128xf32> to vector<16xf32>
    %25 = vector.shape_cast %24 : vector<16xf32> to vector<16x1xf32>
    %cst_18 = arith.constant 1.280000e+02 : f32
    %26 = vector.broadcast %cst_18 : f32 to vector<16x1xf32>
    %27 = arith.divf %25, %26 : vector<16x1xf32>
    %28 = vector.broadcast %27 : vector<16x1xf32> to vector<16x128xf32>
    %29 = arith.subf %21, %28 : vector<16x128xf32>
    %30 = arith.mulf %29, %29 : vector<16x128xf32>
    %cst_19 = arith.constant dense<0.000000e+00> : vector<16xf32>
    %31 = vector.multi_reduction <add>, %30, %cst_19 [1] : vector<16x128xf32> to vector<16xf32>
    %32 = vector.shape_cast %31 : vector<16xf32> to vector<16x1xf32>
    %cst_20 = arith.constant 0.00787401571 : f32
    %33 = vector.broadcast %cst_20 : f32 to vector<16x1xf32>
    %34 = arith.mulf %32, %33 : vector<16x1xf32>
    %35 = math.sqrt %34 : vector<16x1xf32>
    %cst_21 = arith.constant 9.99999997E-7 : f32
    %36 = vector.broadcast %cst_21 : f32 to vector<16x1xf32>
    %37 = arith.maximumf %35, %36 : vector<16x1xf32>
    %38 = vector.broadcast %27 : vector<16x1xf32> to vector<16x128xf32>
    %39 = arith.subf %21, %38 : vector<16x128xf32>
    %40 = vector.broadcast %37 : vector<16x1xf32> to vector<16x128xf32>
    %41 = arith.divf %39, %40 : vector<16x128xf32>
    %42 = vector.broadcast %22 : vector<1x128xf32> to vector<16x128xf32>
    %43 = arith.mulf %41, %42 : vector<16x128xf32>
    %44 = vector.broadcast %23 : vector<1x128xf32> to vector<16x128xf32>
    %45 = arith.addf %43, %44 : vector<16x128xf32>
    %c0_22 = arith.constant 0 : index
    %c0_23 = arith.constant 0 : index
    %46 = vector.load %arg8[%c0_22, %c0_23] : memref<16x128xf32, #tpu.memory_space<vmem>>, vector<16x128xf32>
    tpu.vector_store %arg8[%c0_22, %c0_23], %45 {strides = array<i32>} : memref<16x128xf32, #tpu.memory_space<vmem>>, vector<16x128xf32>,
    return
  }
  func.func @transform_0(%arg0: i32) -> (i32, i32) {
    %c0_i32 = arith.constant 0 : i32
    %c0_i32_0 = arith.constant 0 : i32
    return %arg0, %c0_i32 : i32, i32
  }
  func.func @transform_1(%arg0: i32) -> (i32, i32) {
    %c0_i32 = arith.constant 0 : i32
    %c0_i32_0 = arith.constant 0 : i32
    %c0_i32_1 = arith.constant 0 : i32
    return %c0_i32, %c0_i32_0 : i32, i32
  }
  func.func @transform_2(%arg0: i32) -> (i32, i32) {
    %c0_i32 = arith.constant 0 : i32
    %c0_i32_0 = arith.constant 0 : i32
    %c0_i32_1 = arith.constant 0 : i32
    return %c0_i32, %c0_i32_0 : i32, i32
  }
  func.func @transform_3(%arg0: i32) -> (i32, i32) {
    %c0_i32 = arith.constant 0 : i32
    %c0_i32_0 = arith.constant 0 : i32
    %c0_i32_1 = arith.constant 0 : i32
    return %c0_i32, %c0_i32_0 : i32, i32
  }
  func.func @transform_4(%arg0: i32) -> (i32, i32) {
    %c0_i32 = arith.constant 0 : i32
    %c0_i32_0 = arith.constant 0 : i32
    %c0_i32_1 = arith.constant 0 : i32
    return %c0_i32, %c0_i32_0 : i32, i32
  }
  func.func @transform_5(%arg0: i32) -> (i32, i32) {
    %c0_i32 = arith.constant 0 : i32
    %c0_i32_0 = arith.constant 0 : i32
    %c0_i32_1 = arith.constant 0 : i32
    return %c0_i32, %c0_i32_0 : i32, i32
  }
  func.func @transform_6(%arg0: i32) -> (i32, i32) {
    %c0_i32 = arith.constant 0 : i32
    %c0_i32_0 = arith.constant 0 : i32
    %c0_i32_1 = arith.constant 0 : i32
    return %c0_i32, %c0_i32_0 : i32, i32
  }
  func.func @transform_7(%arg0: i32) -> (i32, i32) {
    %c0_i32 = arith.constant 0 : i32
    %c0_i32_0 = arith.constant 0 : i32
    return %arg0, %c0_i32 : i32, i32
  }
}

</mosaic_0001>

<llo_original>
// kernel: tpu_custom_call.1
$region0: #{tpu_custom_call.1}
  #allocation0 [shape = 'u32[]', space=smem, size = 0x4, offset = 0x4, fixed_abs, tag = 'smem constant byte address 0x4 - core index']
  #allocation1 [shape = 'u32[72,128]{1,0:T(1,128)}', space=vmem, size = 0x9000, scoped, tag = 'internal scratch']
  %s0 = inlined_call_operand.hbm [shape: f32[32,128], index: 0, kind: input, shape index: {}]
  %s1 = inlined_call_operand.hbm [shape: bf16[128,512], index: 1, kind: input, shape index: {}]
  %s2 = inlined_call_operand.hbm [shape: f32[1,512], index: 2, kind: input, shape index: {}]
  %s3 = inlined_call_operand.hbm [shape: bf16[512,128], index: 3, kind: input, shape index: {}]
  %s4 = inlined_call_operand.vmem [shape: f32[1,128], index: 4, kind: input, shape index: {}]
  %s5 = inlined_call_operand.vmem [shape: f32[1,128], index: 5, kind: input, shape index: {}]
  %s6 = inlined_call_operand.vmem [shape: f32[1,128], index: 6, kind: input, shape index: {}]
  %s7 = inlined_call_operand.hbm [shape: f32[32,128], index: 7, kind: output, shape index: {}]
  %s8 = sld [smem:[#allocation0]]
  $region77: #{tpu_custom_call.1} parent=0
    _
  %s10 = ssub.s32 1, %s8
  %s11 = scalar_select 0, %s10, %s8
  $region1: #{tpu_custom_call.1} parent=0
    #allocation2 [shape = 'u8[16384]{0}', space=vmem, size = 0x4000, scoped, tag = 'input window, operand 0']
    #allocation3 [shape = 's32[2]{0}', space=sflag, size = 0x8, scoped, tag = 'scoped memory for tpu_custom_call.1']
    #allocation4 [shape = 's32[2]{0}', space=sflag, size = 0x8, scoped, tag = 'scoped memory for tpu_custom_call.1']
    #allocation5 [shape = 'u8[131072]{0}', space=vmem, size = 0x20000, scoped, tag = 'input window, operand 1, single buffered']
    #allocation6 [shape = 's32[1]{0}', space=sflag, size = 0x4, scoped, tag = 'scoped memory for tpu_custom_call.1']
    #allocation7 [shape = 'u8[2048]{0}', space=vmem, size = 0x800, scoped, tag = 'input window, operand 2, single buffered']
    #allocation8 [shape = 'u8[131072]{0}', space=vmem, size = 0x20000, scoped, tag = 'input window, operand 3, single buffered']
    #allocation9 [shape = 's32[1]{0}', space=sflag, size = 0x4, scoped, tag = 'scoped memory for tpu_custom_call.1']
    #allocation10 [shape = 'u8[16384]{0}', space=vmem, size = 0x4000, scoped, tag = 'output window, operand 0']
    %12 = vsyncpa [#allocation3], 0
    %s13 = scalar_lea.sflag [#allocation3], 1
    %14 = vsyncpa %s13, 0
    %15 = vsyncpa [#allocation6], 0
    %16 = vsyncpa [#allocation9], 0
    %17 = vsyncpa [#allocation4], 0
    %s18 = scalar_lea.sflag [#allocation4], 1
    %19 = vsyncpa %s18, 0
    loop: start=0, step=1, limit=4
    $region2: #{tpu_custom_call.1} parent=1 // loop_pre_header
      _
    $region3: #{tpu_custom_call.1} parent=1 // loop_header
      %s21 = sphi 0, %s25
      %p22 = scmp.ge.s32.totalorder %s21, 4
      %s31 = sphi 0, %s33
      %s34 = sphi 0, %s31
      %s35 = sphi 0, %s34
      %s51 = sphi 0, %s35
      %s55 = sphi 0, %s55
      %s57 = sphi 0, %s55
      %s58 = sphi 0, %s57
      %s72 = sphi 0, %s58
      %s76 = sphi 0, %s76
      %s78 = sphi 0, %s76
      %s79 = sphi 0, %s78
      %s93 = sphi 0, %s79
      %s97 = sphi 0, %s97
      %s99 = sphi 0, %s97
      %s100 = sphi 0, %s99
      %s114 = sphi 0, %s100
      %s118 = sphi 0, %s118
      %s120 = sphi 0, %s118
      %s121 = sphi 0, %s120
      %s135 = sphi 0, %s121
      %s139 = sphi 0, %s139
      %s141 = sphi 0, %s139
      %s142 = sphi 0, %s141
      %s156 = sphi 0, %s142
      %s160 = sphi 0, %s160
      %s162 = sphi 0, %s160
      %s163 = sphi 0, %s162
      %s177 = sphi 0, %s163
      %s183 = sphi 0, %s185
      %s186 = sphi 0, %s183
      %s187 = sphi 0, %s186
      %s203 = sphi 0, %s187
    $region4: #{tpu_custom_call.1} parent=1 // loop_header_branch
      %24 = sbr.rel (%p22) target = $region8
    $region5: #{tpu_custom_call.1} parent=1 // loop_body
      %s26 = ssub.s32 %s21, 1
      %s27 = ssub.s32 %s21, 2
      %s28 = sadd.s32 %s21, 1
      %s29 = ssub.s32 %s21, %s28
      %p30 = scmp.eq.s32.totalorder %s29, 0
      %s32 = sadd.s32 %s31, 1
      %s33 = scalar_select %p30, %s31, %s32
      %p36 = pneg %p30
      %p37 = scmp.eq.s32.totalorder %s21, 1
      %p38 = por %p36, %p37
      %p39 = scmp.ne.s32.totalorder %s31, %s34
      %p40 = scmp.eq.s32.totalorder %s21, 0
      %p41 = por %p39, %p40
      %p42 = scmp.ne.s32.totalorder %s31, %s34
      %p43 = scmp.eq.s32.totalorder %s26, 1
      %p44 = por %p42, %p43
      %p45 = scmp.ne.s32.totalorder %s34, %s35
      %p46 = scmp.eq.s32.totalorder %s26, 0
      %p47 = por %p45, %p46
      %p48 = scmp.ne.s32.totalorder %s34, %s35
      %p49 = scmp.eq.s32.totalorder %s27, 1
      %p50 = por %p48, %p49
      %p52 = scmp.ne.s32.totalorder %s35, %s51
      %p53 = scmp.eq.s32.totalorder %s27, 0
      %p54 = por %p52, %p53
      %s56 = sadd.s32 %s55, 1
      %p59 = scmp.eq.s32.totalorder %s21, 1
      %p60 = scmp.ne.s32.totalorder %s55, %s57
      %p61 = scmp.eq.s32.totalorder %s21, 0
      %p62 = por %p60, %p61
      %p63 = scmp.ne.s32.totalorder %s55, %s57
      %p64 = scmp.eq.s32.totalorder %s26, 1
      %p65 = por %p63, %p64
      %p66 = scmp.ne.s32.totalorder %s57, %s58
      %p67 = scmp.eq.s32.totalorder %s26, 0
      %p68 = por %p66, %p67
      %p69 = scmp.ne.s32.totalorder %s57, %s58
      %p70 = scmp.eq.s32.totalorder %s27, 1
      %p71 = por %p69, %p70
      %p73 = scmp.ne.s32.totalorder %s58, %s72
      %p74 = scmp.eq.s32.totalorder %s27, 0
      %p75 = por %p73, %p74
      %s77 = sadd.s32 %s76, 1
      %p80 = scmp.eq.s32.totalorder %s21, 1
      %p81 = scmp.ne.s32.totalorder %s76, %s78
      %p82 = scmp.eq.s32.totalorder %s21, 0
      %p83 = por %p81, %p82
      %p84 = scmp.ne.s32.totalorder %s76, %s78
      %p85 = scmp.eq.s32.totalorder %s26, 1
      %p86 = por %p84, %p85
      %p87 = scmp.ne.s32.totalorder %s78, %s79
      %p88 = scmp.eq.s32.totalorder %s26, 0
      %p89 = por %p87, %p88
      %p90 = scmp.ne.s32.totalorder %s78, %s79
      %p91 = scmp.eq.s32.totalorder %s27, 1
      %p92 = por %p90, %p91
      %p94 = scmp.ne.s32.totalorder %s79, %s93
      %p95 = scmp.eq.s32.totalorder %s27, 0
      %p96 = por %p94, %p95
      %s98 = sadd.s32 %s97, 1
      %p101 = scmp.eq.s32.totalorder %s21, 1
      %p102 = scmp.ne.s32.totalorder %s97, %s99
      %p103 = scmp.eq.s32.totalorder %s21, 0
      %p104 = por %p102, %p103
      %p105 = scmp.ne.s32.totalorder %s97, %s99
      %p106 = scmp.eq.s32.totalorder %s26, 1
      %p107 = por %p105, %p106
      %p108 = scmp.ne.s32.totalorder %s99, %s100
      %p109 = scmp.eq.s32.totalorder %s26, 0
      %p110 = por %p108, %p109
      %p111 = scmp.ne.s32.totalorder %s99, %s100
      %p112 = scmp.eq.s32.totalorder %s27, 1
      %p113 = por %p111, %p112
      %p115 = scmp.ne.s32.totalorder %s100, %s114
      %p116 = scmp.eq.s32.totalorder %s27, 0
      %p117 = por %p115, %p116
      %s119 = sadd.s32 %s118, 1
      %p122 = scmp.eq.s32.totalorder %s21, 1
      %p123 = scmp.ne.s32.totalorder %s118, %s120
      %p124 = scmp.eq.s32.totalorder %s21, 0
      %p125 = por %p123, %p124
      %p126 = scmp.ne.s32.totalorder %s118, %s120
      %p127 = scmp.eq.s32.totalorder %s26, 1
      %p128 = por %p126, %p127
      %p129 = scmp.ne.s32.totalorder %s120, %s121
      %p130 = scmp.eq.s32.totalorder %s26, 0
      %p131 = por %p129, %p130
      %p132 = scmp.ne.s32.totalorder %s120, %s121
      %p133 = scmp.eq.s32.totalorder %s27, 1
      %p134 = por %p132, %p133
      %p136 = scmp.ne.s32.totalorder %s121, %s135
      %p137 = scmp.eq.s32.totalorder %s27, 0
      %p138 = por %p136, %p137
      %s140 = sadd.s32 %s139, 1
      %p143 = scmp.eq.s32.totalorder %s21, 1
      %p144 = scmp.ne.s32.totalorder %s139, %s141
      %p145 = scmp.eq.s32.totalorder %s21, 0
      %p146 = por %p144, %p145
      %p147 = scmp.ne.s32.totalorder %s139, %s141
      %p148 = scmp.eq.s32.totalorder %s26, 1
      %p149 = por %p147, %p148
      %p150 = scmp.ne.s32.totalorder %s141, %s142
      %p151 = scmp.eq.s32.totalorder %s26, 0
      %p152 = por %p150, %p151
      %p153 = scmp.ne.s32.totalorder %s141, %s142
      %p154 = scmp.eq.s32.totalorder %s27, 1
      %p155 = por %p153, %p154
      %p157 = scmp.ne.s32.totalorder %s142, %s156
      %p158 = scmp.eq.s32.totalorder %s27, 0
      %p159 = por %p157, %p158
      %s161 = sadd.s32 %s160, 1
      %p164 = scmp.eq.s32.totalorder %s21, 1
      %p165 = scmp.ne.s32.totalorder %s160, %s162
      %p166 = scmp.eq.s32.totalorder %s21, 0
      %p167 = por %p165, %p166
      %p168 = scmp.ne.s32.totalorder %s160, %s162
      %p169 = scmp.eq.s32.totalorder %s26, 1
      %p170 = por %p168, %p169
      %p171 = scmp.ne.s32.totalorder %s162, %s163
      %p172 = scmp.eq.s32.totalorder %s26, 0
      %p173 = por %p171, %p172
      %p174 = scmp.ne.s32.totalorder %s162, %s163
      %p175 = scmp.eq.s32.totalorder %s27, 1
      %p176 = por %p174, %p175
      %p178 = scmp.ne.s32.totalorder %s163, %s177
      %p179 = scmp.eq.s32.totalorder %s27, 0
      %p180 = por %p178, %p179
      %s181 = ssub.s32 %s21, %s28
      %p182 = scmp.eq.s32.totalorder %s181, 0
      %s184 = sadd.s32 %s183, 1
      %s185 = scalar_select %p182, %s183, %s184
      %p188 = pneg %p182
      %p189 = scmp.eq.s32.totalorder %s21, 1
      %p190 = por %p188, %p189
      %p191 = scmp.ne.s32.totalorder %s183, %s186
      %p192 = scmp.eq.s32.totalorder %s21, 0
      %p193 = por %p191, %p192
      %p194 = scmp.ne.s32.totalorder %s183, %s186
      %p195 = scmp.eq.s32.totalorder %s26, 1
      %p196 = por %p194, %p195
      %p197 = scmp.ne.s32.totalorder %s186, %s187
      %p198 = scmp.eq.s32.totalorder %s26, 0
      %p199 = por %p197, %p198
      %p200 = scmp.ne.s32.totalorder %s186, %s187
      %p201 = scmp.eq.s32.totalorder %s27, 1
      %p202 = por %p200, %p201
      %p204 = scmp.ne.s32.totalorder %s187, %s203
      %p205 = scmp.eq.s32.totalorder %s27, 0
      %p206 = por %p204, %p205
      %p207 = scmp.le.s32.totalorder 1, %s21
      %p208 = scmp.lt.s32.totalorder %s21, 3
      %p209 = pnand %p207, %p208
      %p210 = pneg %p209
      // Predicated region
      $region9: #{tpu_custom_call.1} parent=5 // pred_check
        _
      $region10: #{tpu_custom_call.1} parent=5 // pred_check_branch
        %212 = sbr.rel (%p209) target = $region12
      $region11: #{tpu_custom_call.1} parent=5 // pred_region
        %s213 = ssub.s32 %s21, 1
        // Predicated region
        $region13: #{tpu_custom_call.1} parent=11 // pred_check
          %p214 = pneg %p68
        $region14: #{tpu_custom_call.1} parent=11 // pred_check_branch
          %216 = sbr.rel (%p214) target = $region16
        $region15: #{tpu_custom_call.1} parent=11 // pred_region
          %218 = vsyncadd [#allocation6], 0
          %s219 = sshll.u32 %s1, 4
          %s220 = int_to_ptr.hbm [resolvable:$true] %s219
          %s221 = sshll.u32 [#allocation5], 4
          %s222 = int_to_ptr.vmem [resolvable:$true] %s221
          %227 = dma.hbm_to_vmem [thread:$0]  %s220, 4096, %s222, [#allocation6], 256, 256, 16
        $region16: #{tpu_custom_call.1} parent=11 // pred_fallthru
          _
        // Predicated region
        $region17: #{tpu_custom_call.1} parent=11 // pred_check
          %p228 = pneg %p89
        $region18: #{tpu_custom_call.1} parent=11 // pred_check_branch
          %230 = sbr.rel (%p228) target = $region20
        $region19: #{tpu_custom_call.1} parent=11 // pred_region
          %232 = vsyncadd [#allocation6], 0
          %s234 = sshll.u32 %s2, 4
          %s235 = int_to_ptr.hbm [resolvable:$true] %s234
          %s236 = sshll.u32 [#allocation7], 4
          %s237 = int_to_ptr.vmem [resolvable:$true] %s236
          %239 = dma.hbm_to_vmem [thread:$0]  %s235, 64, %s237, [#allocation6]
        $region20: #{tpu_custom_call.1} parent=11 // pred_fallthru
          _
        // Predicated region
        $region21: #{tpu_custom_call.1} parent=11 // pred_check
          %p240 = pneg %p110
        $region22: #{tpu_custom_call.1} parent=11 // pred_check_branch
          %242 = sbr.rel (%p240) target = $region24
        $region23: #{tpu_custom_call.1} parent=11 // pred_region
          %244 = vsyncadd [#allocation9], 0
          %s245 = sshll.u32 %s3, 4
          %s246 = int_to_ptr.hbm [resolvable:$true] %s245
          %s247 = sshll.u32 [#allocation8], 4
          %s248 = int_to_ptr.vmem [resolvable:$true] %s247
          %253 = dma.hbm_to_vmem [thread:$0]  %s246, 4096, %s248, [#allocation9], 64, 64, 4
        $region24: #{tpu_custom_call.1} parent=11 // pred_fallthru
          _
        // Predicated region
        $region25: #{tpu_custom_call.1} parent=11 // pred_check
          %p254 = pneg %p131
        $region26: #{tpu_custom_call.1} parent=11 // pred_check_branch
          %256 = sbr.rel (%p254) target = $region28
        $region27: #{tpu_custom_call.1} parent=11 // pred_region
          _
        $region28: #{tpu_custom_call.1} parent=11 // pred_fallthru
          _
        // Predicated region
        $region29: #{tpu_custom_call.1} parent=11 // pred_check
          %p257 = pneg %p152
        $region30: #{tpu_custom_call.1} parent=11 // pred_check_branch
          %259 = sbr.rel (%p257) target = $region32
        $region31: #{tpu_custom_call.1} parent=11 // pred_region
          _
        $region32: #{tpu_custom_call.1} parent=11 // pred_fallthru
          _
        // Predicated region
        $region33: #{tpu_custom_call.1} parent=11 // pred_check
          %p260 = pneg %p173
        $region34: #{tpu_custom_call.1} parent=11 // pred_check_branch
          %262 = sbr.rel (%p260) target = $region36
        $region35: #{tpu_custom_call.1} parent=11 // pred_region
          _
        $region36: #{tpu_custom_call.1} parent=11 // pred_fallthru
          _
      $region12: #{tpu_custom_call.1} parent=5 // pred_fallthru
        _
      %p263 = scmp.lt.s32.totalorder %s21, 2
      // Predicated region
      $region37: #{tpu_custom_call.1} parent=5 // pred_check
        %p264 = pneg %p263
      $region38: #{tpu_custom_call.1} parent=5 // pred_check_branch
        %266 = sbr.rel (%p264) target = $region40
      $region39: #{tpu_custom_call.1} parent=5 // pred_region
        // Predicated region
        $region41: #{tpu_custom_call.1} parent=39 // pred_check
          %p267 = pneg %p41
        $region42: #{tpu_custom_call.1} parent=39 // pred_check_branch
          %269 = sbr.rel (%p267) target = $region44
        $region43: #{tpu_custom_call.1} parent=39 // pred_region
          %s270 = sand.u32 %s31, 1
          %s271 = scalar_lea.sflag [#allocation3], %s270
          %s272 = sand.u32 %s31, 1
          %s273 = smul.addr %s272, 16
          %s274 = scalar_lea.vmem [#allocation2], %s273
          %s275 = smul.u32 2, %s21
          %277 = vsyncadd %s271, 0
          %s278 = smul.addr %s275, 8
          %s279 = scalar_lea.hbm %s0, %s278
          %s280 = sshll.u32 %s279, 4
          %s281 = int_to_ptr.hbm [resolvable:$true] %s280
          %s282 = sshll.u32 %s274, 4
          %s283 = int_to_ptr.vmem [resolvable:$true] %s282
          %288 = dma.hbm_to_vmem [thread:$0]  %s281, 256, %s283, %s271, 128, 128, 8
        $region44: #{tpu_custom_call.1} parent=39 // pred_fallthru
          _
      $region40: #{tpu_custom_call.1} parent=5 // pred_fallthru
        _
      %p289 = scmp.le.s32.totalorder 1, %s21
      %p290 = scmp.lt.s32.totalorder %s21, 3
      %p291 = pnand %p289, %p290
      %p292 = pneg %p291
      // Predicated region
      $region45: #{tpu_custom_call.1} parent=5 // pred_check
        _
      $region46: #{tpu_custom_call.1} parent=5 // pred_check_branch
        %294 = sbr.rel (%p291) target = $region48
      $region47: #{tpu_custom_call.1} parent=5 // pred_region
        %s295 = ssub.s32 %s21, 1
        %s296 = sand.u32 %s34, 1
        %s297 = scalar_lea.sflag [#allocation3], %s296
        %s298 = sand.u32 %s34, 1
        %s299 = smul.addr %s298, 16
        %s300 = scalar_lea.vmem [#allocation2], %s299
        // Predicated region
        $region49: #{tpu_custom_call.1} parent=47 // pred_check
          %p301 = pneg %p47
        $region50: #{tpu_custom_call.1} parent=47 // pred_check_branch
          %303 = sbr.rel (%p301) target = $region52
        $region51: #{tpu_custom_call.1} parent=47 // pred_region
          %305 = dma.done %s297, 256
        $region52: #{tpu_custom_call.1} parent=47 // pred_fallthru
          _
        // Predicated region
        $region53: #{tpu_custom_call.1} parent=47 // pred_check
          %p306 = pneg %p68
        $region54: #{tpu_custom_call.1} parent=47 // pred_check_branch
          %308 = sbr.rel (%p306) target = $region56
        $region55: #{tpu_custom_call.1} parent=47 // pred_region
          %310 = dma.done [#allocation6], 4096
        $region56: #{tpu_custom_call.1} parent=47 // pred_fallthru
          _
        // Predicated region
        $region57: #{tpu_custom_call.1} parent=47 // pred_check
          %p311 = pneg %p89
        $region58: #{tpu_custom_call.1} parent=47 // pred_check_branch
          %313 = sbr.rel (%p311) target = $region60
        $region59: #{tpu_custom_call.1} parent=47 // pred_region
          %315 = dma.done [#allocation6], 64
        $region60: #{tpu_custom_call.1} parent=47 // pred_fallthru
          _
        // Predicated region
        $region61: #{tpu_custom_call.1} parent=47 // pred_check
          %p316 = pneg %p110
        $region62: #{tpu_custom_call.1} parent=47 // pred_check_branch
          %318 = sbr.rel (%p316) target = $region64
        $region63: #{tpu_custom_call.1} parent=47 // pred_region
          %320 = dma.done [#allocation9], 4096
        $region64: #{tpu_custom_call.1} parent=47 // pred_fallthru
          _
        %s321 = sand.u32 %s34, 1
        %s322 = scalar_lea.sflag [#allocation3], %s321
        %s323 = sand.u32 %s34, 1
        %s324 = smul.addr %s323, 16
        %s325 = scalar_lea.vmem [#allocation2], %s324
        %p326 = pneg %p47
        %p327 = pneg %p44
        %p328 = pneg %p68
        %p329 = pneg %p65
        %p330 = pneg %p89
        %p331 = pneg %p86
        %p332 = pneg %p110
        %p333 = pneg %p107
        %p334 = pneg %p131
        %p335 = pneg %p128
        %p336 = pneg %p152
        %p337 = pneg %p149
        %p338 = pneg %p173
        %p339 = pneg %p170
        %p340 = pneg %p199
        %p341 = pneg %p196
        %s342 = sand.u32 %s186, 1
        %s343 = scalar_lea.sflag [#allocation4], %s342
        %s344 = sand.u32 %s186, 1
        %s345 = smul.addr %s344, 16
        %s346 = scalar_lea.vmem [#allocation10], %s345
        %s347 = smul.u32 2, %s26
        %s348 = smul.u32 2, %s26
        %v349 = vld [vmem:[%s300] sm:$0xff]
        %v350 = vld [vmem:[%s300 + $0x8] sm:$0xff]
        %v351 = vpack.c.bf16 %v350, %v349
        %v352 = vld [vmem:[#allocation5] sm:$0xff]
        %v353 = vld [vmem:[#allocation5 + $0x8] sm:$0xff]
        %v354 = vld [vmem:[#allocation5 + $0x10] sm:$0xff]
        %v355 = vld [vmem:[#allocation5 + $0x18] sm:$0xff]
        %v356 = vld [vmem:[#allocation5 + $0x20] sm:$0xff]
        %v357 = vld [vmem:[#allocation5 + $0x28] sm:$0xff]
        %v358 = vld [vmem:[#allocation5 + $0x30] sm:$0xff]
        %v359 = vld [vmem:[#allocation5 + $0x38] sm:$0xff]
        %v360 = vld [vmem:[#allocation5 + $0x40] sm:$0xff]
        %v361 = vld [vmem:[#allocation5 + $0x48] sm:$0xff]
        %v362 = vld [vmem:[#allocation5 + $0x50] sm:$0xff]
        %v363 = vld [vmem:[#allocation5 + $0x58] sm:$0xff]
        %v364 = vld [vmem:[#allocation5 + $0x60] sm:$0xff]
        %v365 = vld [vmem:[#allocation5 + $0x68] sm:$0xff]
        %v366 = vld [vmem:[#allocation5 + $0x70] sm:$0xff]
        %v367 = vld [vmem:[#allocation5 + $0x78] sm:$0xff]
        %v368 = vld [vmem:[#allocation5 + $0x80] sm:$0xff]
        %v369 = vld [vmem:[#allocation5 + $0x88] sm:$0xff]
        %v370 = vld [vmem:[#allocation5 + $0x90] sm:$0xff]
        %v371 = vld [vmem:[#allocation5 + $0x98] sm:$0xff]
        %v372 = vld [vmem:[#allocation5 + $0xa0] sm:$0xff]
        %v373 = vld [vmem:[#allocation5 + $0xa8] sm:$0xff]
        %v374 = vld [vmem:[#allocation5 + $0xb0] sm:$0xff]
        %v375 = vld [vmem:[#allocation5 + $0xb8] sm:$0xff]
        %v376 = vld [vmem:[#allocation5 + $0xc0] sm:$0xff]
        %v377 = vld [vmem:[#allocation5 + $0xc8] sm:$0xff]
        %v378 = vld [vmem:[#allocation5 + $0xd0] sm:$0xff]
        %v379 = vld [vmem:[#allocation5 + $0xd8] sm:$0xff]
        %v380 = vld [vmem:[#allocation5 + $0xe0] sm:$0xff]
        %v381 = vld [vmem:[#allocation5 + $0xe8] sm:$0xff]
        %v382 = vld [vmem:[#allocation5 + $0xf0] sm:$0xff]
        %v383 = vld [vmem:[#allocation5 + $0xf8] sm:$0xff]
        %v384 = vld [vmem:[#allocation7] sm:$0xf]
        %v386 = vperm.slane %v384, 0
        %v387 = vperm.slane %v384, 1
        %v388 = vperm.slane %v384, 2
        %v389 = vperm.slane %v384, 3
        %v426 = vunpack.c.l.b16 %v352
        %v427 = vunpack.c.h.b16 %v352
        %v428 = vunpack.c.l.b16 %v353
        %v429 = vunpack.c.h.b16 %v353
        %v430 = vunpack.c.l.b16 %v354
        %v431 = vunpack.c.h.b16 %v354
        %v432 = vunpack.c.l.b16 %v355
        %v433 = vunpack.c.h.b16 %v355
        %v434 = vunpack.c.l.b16 %v356
        %v435 = vunpack.c.h.b16 %v356
        %v436 = vunpack.c.l.b16 %v357
        %v437 = vunpack.c.h.b16 %v357
        %v438 = vunpack.c.l.b16 %v358
        %v439 = vunpack.c.h.b16 %v358
        %v440 = vunpack.c.l.b16 %v359
        %v441 = vunpack.c.h.b16 %v359
        %v442 = vunpack.c.l.b16 %v360
        %v443 = vunpack.c.h.b16 %v360
        %v444 = vunpack.c.l.b16 %v361
        %v445 = vunpack.c.h.b16 %v361
        %v446 = vunpack.c.l.b16 %v362
        %v447 = vunpack.c.h.b16 %v362
        %v448 = vunpack.c.l.b16 %v363
        %v449 = vunpack.c.h.b16 %v363
        %v450 = vunpack.c.l.b16 %v364
        %v451 = vunpack.c.h.b16 %v364
        %v452 = vunpack.c.l.b16 %v365
        %v453 = vunpack.c.h.b16 %v365
        %v454 = vunpack.c.l.b16 %v366
        %v455 = vunpack.c.h.b16 %v366
        %v456 = vunpack.c.l.b16 %v367
        %v457 = vunpack.c.h.b16 %v367
        %v458 = vunpack.c.l.b16 %v368
        %v459 = vunpack.c.h.b16 %v368
        %v460 = vunpack.c.l.b16 %v369
        %v461 = vunpack.c.h.b16 %v369
        %v462 = vunpack.c.l.b16 %v370
        %v463 = vunpack.c.h.b16 %v370
        %v464 = vunpack.c.l.b16 %v371
        %v465 = vunpack.c.h.b16 %v371
        %v466 = vunpack.c.l.b16 %v372
        %v467 = vunpack.c.h.b16 %v372
        %v468 = vunpack.c.l.b16 %v373
        %v469 = vunpack.c.h.b16 %v373
        %v470 = vunpack.c.l.b16 %v374
        %v471 = vunpack.c.h.b16 %v374
        %v472 = vunpack.c.l.b16 %v375
        %v473 = vunpack.c.h.b16 %v375
        %v474 = vunpack.c.l.b16 %v376
        %v475 = vunpack.c.h.b16 %v376
        %v476 = vunpack.c.l.b16 %v377
        %v477 = vunpack.c.h.b16 %v377
        %v478 = vunpack.c.l.b16 %v378
        %v479 = vunpack.c.h.b16 %v378
        %v480 = vunpack.c.l.b16 %v379
        %v481 = vunpack.c.h.b16 %v379
        %v482 = vunpack.c.l.b16 %v380
        %v483 = vunpack.c.h.b16 %v380
        %v484 = vunpack.c.l.b16 %v381
        %v485 = vunpack.c.h.b16 %v381
        %v486 = vunpack.c.l.b16 %v382
        %v487 = vunpack.c.h.b16 %v382
        %v488 = vunpack.c.l.b16 %v383
        %v489 = vunpack.c.h.b16 %v383
        %v490 = vpack.c.b16 %v430, %v426
        %v491 = vpack.c.b16 %v431, %v427
        %v492 = vpack.c.b16 %v432, %v428
        %v493 = vpack.c.b16 %v433, %v429
        %v494 = vpack.c.b16 %v438, %v434
        %v495 = vpack.c.b16 %v439, %v435
        %v496 = vpack.c.b16 %v440, %v436
        %v497 = vpack.c.b16 %v441, %v437
        %v498 = vpack.c.b16 %v446, %v442
        %v499 = vpack.c.b16 %v447, %v443
        %v500 = vpack.c.b16 %v448, %v444
        %v501 = vpack.c.b16 %v449, %v445
        %v502 = vpack.c.b16 %v454, %v450
        %v503 = vpack.c.b16 %v455, %v451
        %v504 = vpack.c.b16 %v456, %v452
        %v505 = vpack.c.b16 %v457, %v453
        %v506 = vpack.c.b16 %v462, %v458
        %v507 = vpack.c.b16 %v463, %v459
        %v508 = vpack.c.b16 %v464, %v460
        %v509 = vpack.c.b16 %v465, %v461
        %v510 = vpack.c.b16 %v470, %v466
        %v511 = vpack.c.b16 %v471, %v467
        %v512 = vpack.c.b16 %v472, %v468
        %v513 = vpack.c.b16 %v473, %v469
        %v514 = vpack.c.b16 %v478, %v474
        %v515 = vpack.c.b16 %v479, %v475
        %v516 = vpack.c.b16 %v480, %v476
        %v517 = vpack.c.b16 %v481, %v477
        %v518 = vpack.c.b16 %v486, %v482
        %v519 = vpack.c.b16 %v487, %v483
        %v520 = vpack.c.b16 %v488, %v484
        %v521 = vpack.c.b16 %v489, %v485
        %554 = vmatpush.bf16.msra.mxu0 %v518
        %555 = vmatpush.bf16.msra.mxu0 %v514
        %556 = vmatpush.bf16.msra.mxu0 %v510
        %557 = vmatpush.bf16.msra.mxu0 %v506
        %558 = vmatpush.bf16.msra.mxu0 %v502
        %559 = vmatpush.bf16.msra.mxu0 %v498
        %560 = vmatpush.bf16.msra.mxu0 %v494
        %561 = vmatpush.bf16.msra.mxu0 %v490
        %562 = vmatmul.bf16.gmra.mxu0 %v351
        %v563 = vpop.f32.mrf.mxu0
        %v564 = vadd.f32 %v386, %v563
        %v565 = vpop.f32.mrf.mxu0
        %v566 = vadd.f32 %v386, %v565
        %567 = vdwg.mxu0
        %568 = vmatpush.bf16.msra.mxu0 %v519
        %569 = vmatpush.bf16.msra.mxu0 %v515
        %570 = vmatpush.bf16.msra.mxu0 %v511
        %571 = vmatpush.bf16.msra.mxu0 %v507
        %572 = vmatpush.bf16.msra.mxu0 %v503
        %573 = vmatpush.bf16.msra.mxu0 %v499
        %574 = vmatpush.bf16.msra.mxu0 %v495
        %575 = vmatpush.bf16.msra.mxu0 %v491
        %576 = vmatmul.bf16.gmra.mxu0 %v351
        %v577 = vpop.f32.mrf.mxu0
        %v578 = vadd.f32 %v387, %v577
        %v579 = vpop.f32.mrf.mxu0
        %v580 = vadd.f32 %v387, %v579
        %581 = vdwg.mxu0
        %582 = vmatpush.bf16.msra.mxu0 %v520
        %583 = vmatpush.bf16.msra.mxu0 %v516
        %584 = vmatpush.bf16.msra.mxu0 %v512
        %585 = vmatpush.bf16.msra.mxu0 %v508
        %586 = vmatpush.bf16.msra.mxu0 %v504
        %587 = vmatpush.bf16.msra.mxu0 %v500
        %588 = vmatpush.bf16.msra.mxu0 %v496
        %589 = vmatpush.bf16.msra.mxu0 %v492
        %590 = vmatmul.bf16.gmra.mxu0 %v351
        %v591 = vpop.f32.mrf.mxu0
        %v592 = vadd.f32 %v388, %v591
        %v593 = vpop.f32.mrf.mxu0
        %v594 = vadd.f32 %v388, %v593
        %595 = vdwg.mxu0
        %596 = vmatpush.bf16.msra.mxu0 %v521
        %597 = vmatpush.bf16.msra.mxu0 %v517
        %598 = vmatpush.bf16.msra.mxu0 %v513
        %599 = vmatpush.bf16.msra.mxu0 %v509
        %600 = vmatpush.bf16.msra.mxu0 %v505
        %601 = vmatpush.bf16.msra.mxu0 %v501
        %602 = vmatpush.bf16.msra.mxu0 %v497
        %603 = vmatpush.bf16.msra.mxu0 %v493
        %604 = vmatmul.bf16.gmra.mxu0 %v351
        %v605 = vpop.f32.mrf.mxu0
        %v606 = vadd.f32 %v389, %v605
        %v607 = vpop.f32.mrf.mxu0
        %v608 = vadd.f32 %v389, %v607
        %609 = vdwg.mxu0
        %v610 = vmul.f32 %v564, 0.5
        %v611 = vmul.f32 %v578, 0.5
        %v612 = vmul.f32 %v592, 0.5
        %v613 = vmul.f32 %v606, 0.5
        %v614 = vmul.f32 %v566, 0.5
        %v615 = vmul.f32 %v580, 0.5
        %v616 = vmul.f32 %v594, 0.5
        %v617 = vmul.f32 %v608, 0.5
        %v618 = vmul.f32 %v564, 0.70710677
        %v619 = vmul.f32 %v578, 0.70710677
        %v620 = vmul.f32 %v592, 0.70710677
        %v621 = vmul.f32 %v606, 0.70710677
        %v622 = vmul.f32 %v566, 0.70710677
        %v623 = vmul.f32 %v580, 0.70710677
        %v624 = vmul.f32 %v594, 0.70710677
        %v625 = vmul.f32 %v608, 0.70710677
        %v626 = vmul.f32 %v618, %v618
        %v627 = vmin.f32 16.0, %v626
        %v628 = vmul.f32 %v627, 2.1237322e-06
        %v629 = vadd.f32 %v628, 0.00028619796
        %v630 = vmul.f32 %v627, %v629
        %v631 = vadd.f32 %v630, 0.0036580483
        %v632 = vmul.f32 %v627, %v631
        %v633 = vadd.f32 %v632, 0.05243302
        %v634 = vmul.f32 %v627, %v633
        %v635 = vadd.f32 %v634, 0.18741608
        %v636 = vmul.f32 %v627, %v635
        %v637 = vadd.f32 %v636, 1.1283791
        %v638 = vmul.f32 %v618, %v637
        %v639 = vmul.f32 %v627, 3.8918573e-05
        %v640 = vadd.f32 %v639, 0.001143296
        %v641 = vmul.f32 %v627, %v640
        %v642 = vadd.f32 %v641, 0.014752088
        %v643 = vmul.f32 %v627, %v642
        %v644 = vadd.f32 %v643, 0.112945676
        %v645 = vmul.f32 %v627, %v644
        %v646 = vadd.f32 %v645, 0.4994258
        %v647 = vmul.f32 %v627, %v646
        %v648 = vadd.f32 %v647, 1.0
        %v649 = vrcp.pop %v648
        %v650 = vmul.f32 %v648, %v649
        %v651 = vsub.f32 1.0, %v650
        %v652 = vmul.f32 %v649, %v651
        %v653 = vadd.f32 %v649, %v652
        %vm654 = vweird.f32 %v648
        %vm655 = vweird.f32 %v649
        %vm656 = vmor %vm654, %vm655
        %v657 = vsel %vm656, %v649, %v653
        %v658 = vand.u32 2147483647, %v648
        %vm659 = vcmp.eq.f32.partialorder %v658, 8.507059e+37
        %v660 = vand.u32 %v648, 2147483648
        %v661 = vor.u32 1.1754944e-38, %v660
        %v662 = vsel %vm659, %v661, %v657
        %v663 = vmul.f32 %v638, %v662
        %v664 = vmin.f32 %v663, 1.0
        %v665 = vmax.f32 %v664, -1.0
        %v666 = vmul.f32 %v619, %v619
        %v667 = vmin.f32 16.0, %v666
        %v668 = vmul.f32 %v667, 2.1237322e-06
        %v669 = vadd.f32 %v668, 0.00028619796
        %v670 = vmul.f32 %v667, %v669
        %v671 = vadd.f32 %v670, 0.0036580483
        %v672 = vmul.f32 %v667, %v671
        %v673 = vadd.f32 %v672, 0.05243302
        %v674 = vmul.f32 %v667, %v673
        %v675 = vadd.f32 %v674, 0.18741608
        %v676 = vmul.f32 %v667, %v675
        %v677 = vadd.f32 %v676, 1.1283791
        %v678 = vmul.f32 %v619, %v677
        %v679 = vmul.f32 %v667, 3.8918573e-05
        %v680 = vadd.f32 %v679, 0.001143296
        %v681 = vmul.f32 %v667, %v680
        %v682 = vadd.f32 %v681, 0.014752088
        %v683 = vmul.f32 %v667, %v682
        %v684 = vadd.f32 %v683, 0.112945676
        %v685 = vmul.f32 %v667, %v684
        %v686 = vadd.f32 %v685, 0.4994258
        %v687 = vmul.f32 %v667, %v686
        %v688 = vadd.f32 %v687, 1.0
        %v689 = vrcp.pop %v688
        %v690 = vmul.f32 %v688, %v689
        %v691 = vsub.f32 1.0, %v690
        %v692 = vmul.f32 %v689, %v691
        %v693 = vadd.f32 %v689, %v692
        %vm694 = vweird.f32 %v688
        %vm695 = vweird.f32 %v689
        %vm696 = vmor %vm694, %vm695
        %v697 = vsel %vm696, %v689, %v693
        %v698 = vand.u32 2147483647, %v688
        %vm699 = vcmp.eq.f32.partialorder %v698, 8.507059e+37
        %v700 = vand.u32 %v688, 2147483648
        %v701 = vor.u32 1.1754944e-38, %v700
        %v702 = vsel %vm699, %v701, %v697
        %v703 = vmul.f32 %v678, %v702
        %v704 = vmin.f32 %v703, 1.0
        %v705 = vmax.f32 %v704, -1.0
        %v706 = vmul.f32 %v620, %v620
        %v707 = vmin.f32 16.0, %v706
        %v708 = vmul.f32 %v707, 2.1237322e-06
        %v709 = vadd.f32 %v708, 0.00028619796
        %v710 = vmul.f32 %v707, %v709
        %v711 = vadd.f32 %v710, 0.0036580483
        %v712 = vmul.f32 %v707, %v711
        %v713 = vadd.f32 %v712, 0.05243302
        %v714 = vmul.f32 %v707, %v713
        %v715 = vadd.f32 %v714, 0.18741608
        %v716 = vmul.f32 %v707, %v715
        %v717 = vadd.f32 %v716, 1.1283791
        %v718 = vmul.f32 %v620, %v717
        %v719 = vmul.f32 %v707, 3.8918573e-05
        %v720 = vadd.f32 %v719, 0.001143296
        %v721 = vmul.f32 %v707, %v720
        %v722 = vadd.f32 %v721, 0.014752088
        %v723 = vmul.f32 %v707, %v722
        %v724 = vadd.f32 %v723, 0.112945676
        %v725 = vmul.f32 %v707, %v724
        %v726 = vadd.f32 %v725, 0.4994258
        %v727 = vmul.f32 %v707, %v726
        %v728 = vadd.f32 %v727, 1.0
        %v729 = vrcp.pop %v728
        %v730 = vmul.f32 %v728, %v729
        %v731 = vsub.f32 1.0, %v730
        %v732 = vmul.f32 %v729, %v731
        %v733 = vadd.f32 %v729, %v732
        %vm734 = vweird.f32 %v728
        %vm735 = vweird.f32 %v729
        %vm736 = vmor %vm734, %vm735
        %v737 = vsel %vm736, %v729, %v733
        %v738 = vand.u32 2147483647, %v728
        %vm739 = vcmp.eq.f32.partialorder %v738, 8.507059e+37
        %v740 = vand.u32 %v728, 2147483648
        %v741 = vor.u32 1.1754944e-38, %v740
        %v742 = vsel %vm739, %v741, %v737
        %v743 = vmul.f32 %v718, %v742
        %v744 = vmin.f32 %v743, 1.0
        %v745 = vmax.f32 %v744, -1.0
        %v746 = vmul.f32 %v621, %v621
        %v747 = vmin.f32 16.0, %v746
        %v748 = vmul.f32 %v747, 2.1237322e-06
        %v749 = vadd.f32 %v748, 0.00028619796
        %v750 = vmul.f32 %v747, %v749
        %v751 = vadd.f32 %v750, 0.0036580483
        %v752 = vmul.f32 %v747, %v751
        %v753 = vadd.f32 %v752, 0.05243302
        %v754 = vmul.f32 %v747, %v753
        %v755 = vadd.f32 %v754, 0.18741608
        %v756 = vmul.f32 %v747, %v755
        %v757 = vadd.f32 %v756, 1.1283791
        %v758 = vmul.f32 %v621, %v757
        %v759 = vmul.f32 %v747, 3.8918573e-05
        %v760 = vadd.f32 %v759, 0.001143296
        %v761 = vmul.f32 %v747, %v760
        %v762 = vadd.f32 %v761, 0.014752088
        %v763 = vmul.f32 %v747, %v762
        %v764 = vadd.f32 %v763, 0.112945676
        %v765 = vmul.f32 %v747, %v764
        %v766 = vadd.f32 %v765, 0.4994258
        %v767 = vmul.f32 %v747, %v766
        %v768 = vadd.f32 %v767, 1.0
        %v769 = vrcp.pop %v768
        %v770 = vmul.f32 %v768, %v769
        %v771 = vsub.f32 1.0, %v770
        %v772 = vmul.f32 %v769, %v771
        %v773 = vadd.f32 %v769, %v772
        %vm774 = vweird.f32 %v768
        %vm775 = vweird.f32 %v769
        %vm776 = vmor %vm774, %vm775
        %v777 = vsel %vm776, %v769, %v773
        %v778 = vand.u32 2147483647, %v768
        %vm779 = vcmp.eq.f32.partialorder %v778, 8.507059e+37
        %v780 = vand.u32 %v768, 2147483648
        %v781 = vor.u32 1.1754944e-38, %v780
        %v782 = vsel %vm779, %v781, %v777
        %v783 = vmul.f32 %v758, %v782
        %v784 = vmin.f32 %v783, 1.0
        %v785 = vmax.f32 %v784, -1.0
        %v786 = vmul.f32 %v622, %v622
        %v787 = vmin.f32 16.0, %v786
        %v788 = vmul.f32 %v787, 2.1237322e-06
        %v789 = vadd.f32 %v788, 0.00028619796
        %v790 = vmul.f32 %v787, %v789
        %v791 = vadd.f32 %v790, 0.0036580483
        %v792 = vmul.f32 %v787, %v791
        %v793 = vadd.f32 %v792, 0.05243302
        %v794 = vmul.f32 %v787, %v793
        %v795 = vadd.f32 %v794, 0.18741608
        %v796 = vmul.f32 %v787, %v795
        %v797 = vadd.f32 %v796, 1.1283791
        %v798 = vmul.f32 %v622, %v797
        %v799 = vmul.f32 %v787, 3.8918573e-05
        %v800 = vadd.f32 %v799, 0.001143296
        %v801 = vmul.f32 %v787, %v800
        %v802 = vadd.f32 %v801, 0.014752088
        %v803 = vmul.f32 %v787, %v802
        %v804 = vadd.f32 %v803, 0.112945676
        %v805 = vmul.f32 %v787, %v804
        %v806 = vadd.f32 %v805, 0.4994258
        %v807 = vmul.f32 %v787, %v806
        %v808 = vadd.f32 %v807, 1.0
        %v809 = vrcp.pop %v808
        %v810 = vmul.f32 %v808, %v809
        %v811 = vsub.f32 1.0, %v810
        %v812 = vmul.f32 %v809, %v811
        %v813 = vadd.f32 %v809, %v812
        %vm814 = vweird.f32 %v808
        %vm815 = vweird.f32 %v809
        %vm816 = vmor %vm814, %vm815
        %v817 = vsel %vm816, %v809, %v813
        %v818 = vand.u32 2147483647, %v808
        %vm819 = vcmp.eq.f32.partialorder %v818, 8.507059e+37
        %v820 = vand.u32 %v808, 2147483648
        %v821 = vor.u32 1.1754944e-38, %v820
        %v822 = vsel %vm819, %v821, %v817
        %v823 = vmul.f32 %v798, %v822
        %v824 = vmin.f32 %v823, 1.0
        %v825 = vmax.f32 %v824, -1.0
        %v826 = vmul.f32 %v623, %v623
        %v827 = vmin.f32 16.0, %v826
        %v828 = vmul.f32 %v827, 2.1237322e-06
        %v829 = vadd.f32 %v828, 0.00028619796
        %v830 = vmul.f32 %v827, %v829
        %v831 = vadd.f32 %v830, 0.0036580483
        %v832 = vmul.f32 %v827, %v831
        %v833 = vadd.f32 %v832, 0.05243302
        %v834 = vmul.f32 %v827, %v833
        %v835 = vadd.f32 %v834, 0.18741608
        %v836 = vmul.f32 %v827, %v835
        %v837 = vadd.f32 %v836, 1.1283791
        %v838 = vmul.f32 %v623, %v837
        %v839 = vmul.f32 %v827, 3.8918573e-05
        %v840 = vadd.f32 %v839, 0.001143296
        %v841 = vmul.f32 %v827, %v840
        %v842 = vadd.f32 %v841, 0.014752088
        %v843 = vmul.f32 %v827, %v842
        %v844 = vadd.f32 %v843, 0.112945676
        %v845 = vmul.f32 %v827, %v844
        %v846 = vadd.f32 %v845, 0.4994258
        %v847 = vmul.f32 %v827, %v846
        %v848 = vadd.f32 %v847, 1.0
        %v849 = vrcp.pop %v848
        %v850 = vmul.f32 %v848, %v849
        %v851 = vsub.f32 1.0, %v850
        %v852 = vmul.f32 %v849, %v851
        %v853 = vadd.f32 %v849, %v852
        %vm854 = vweird.f32 %v848
        %vm855 = vweird.f32 %v849
        %vm856 = vmor %vm854, %vm855
        %v857 = vsel %vm856, %v849, %v853
        %v858 = vand.u32 2147483647, %v848
        %vm859 = vcmp.eq.f32.partialorder %v858, 8.507059e+37
        %v860 = vand.u32 %v848, 2147483648
        %v861 = vor.u32 1.1754944e-38, %v860
        %v862 = vsel %vm859, %v861, %v857
        %v863 = vmul.f32 %v838, %v862
        %v864 = vmin.f32 %v863, 1.0
        %v865 = vmax.f32 %v864, -1.0
        %v866 = vmul.f32 %v624, %v624
        %v867 = vmin.f32 16.0, %v866
        %v868 = vmul.f32 %v867, 2.1237322e-06
        %v869 = vadd.f32 %v868, 0.00028619796
        %v870 = vmul.f32 %v867, %v869
        %v871 = vadd.f32 %v870, 0.0036580483
        %v872 = vmul.f32 %v867, %v871
        %v873 = vadd.f32 %v872, 0.05243302
        %v874 = vmul.f32 %v867, %v873
        %v875 = vadd.f32 %v874, 0.18741608
        %v876 = vmul.f32 %v867, %v875
        %v877 = vadd.f32 %v876, 1.1283791
        %v878 = vmul.f32 %v624, %v877
        %v879 = vmul.f32 %v867, 3.8918573e-05
        %v880 = vadd.f32 %v879, 0.001143296
        %v881 = vmul.f32 %v867, %v880
        %v882 = vadd.f32 %v881, 0.014752088
        %v883 = vmul.f32 %v867, %v882
        %v884 = vadd.f32 %v883, 0.112945676
        %v885 = vmul.f32 %v867, %v884
        %v886 = vadd.f32 %v885, 0.4994258
        %v887 = vmul.f32 %v867, %v886
        %v888 = vadd.f32 %v887, 1.0
        %v889 = vrcp.pop %v888
        %v890 = vmul.f32 %v888, %v889
        %v891 = vsub.f32 1.0, %v890
        %v892 = vmul.f32 %v889, %v891
        %v893 = vadd.f32 %v889, %v892
        %vm894 = vweird.f32 %v888
        %vm895 = vweird.f32 %v889
        %vm896 = vmor %vm894, %vm895
        %v897 = vsel %vm896, %v889, %v893
        %v898 = vand.u32 2147483647, %v888
        %vm899 = vcmp.eq.f32.partialorder %v898, 8.507059e+37
        %v900 = vand.u32 %v888, 2147483648
        %v901 = vor.u32 1.1754944e-38, %v900
        %v902 = vsel %vm899, %v901, %v897
        %v903 = vmul.f32 %v878, %v902
        %v904 = vmin.f32 %v903, 1.0
        %v905 = vmax.f32 %v904, -1.0
        %v906 = vmul.f32 %v625, %v625
        %v907 = vmin.f32 16.0, %v906
        %v908 = vmul.f32 %v907, 2.1237322e-06
        %v909 = vadd.f32 %v908, 0.00028619796
        %v910 = vmul.f32 %v907, %v909
        %v911 = vadd.f32 %v910, 0.0036580483
        %v912 = vmul.f32 %v907, %v911
        %v913 = vadd.f32 %v912, 0.05243302
        %v914 = vmul.f32 %v907, %v913
        %v915 = vadd.f32 %v914, 0.18741608
        %v916 = vmul.f32 %v907, %v915
        %v917 = vadd.f32 %v916, 1.1283791
        %v918 = vmul.f32 %v625, %v917
        %v919 = vmul.f32 %v907, 3.8918573e-05
        %v920 = vadd.f32 %v919, 0.001143296
        %v921 = vmul.f32 %v907, %v920
        %v922 = vadd.f32 %v921, 0.014752088
        %v923 = vmul.f32 %v907, %v922
        %v924 = vadd.f32 %v923, 0.112945676
        %v925 = vmul.f32 %v907, %v924
        %v926 = vadd.f32 %v925, 0.4994258
        %v927 = vmul.f32 %v907, %v926
        %v928 = vadd.f32 %v927, 1.0
        %v929 = vrcp.pop %v928
        %v930 = vmul.f32 %v928, %v929
        %v931 = vsub.f32 1.0, %v930
        %v932 = vmul.f32 %v929, %v931
        %v933 = vadd.f32 %v929, %v932
        %vm934 = vweird.f32 %v928
        %vm935 = vweird.f32 %v929
        %vm936 = vmor %vm934, %vm935
        %v937 = vsel %vm936, %v929, %v933
        %v938 = vand.u32 2147483647, %v928
        %vm939 = vcmp.eq.f32.partialorder %v938, 8.507059e+37
        %v940 = vand.u32 %v928, 2147483648
        %v941 = vor.u32 1.1754944e-38, %v940
        %v942 = vsel %vm939, %v941, %v937
        %v943 = vmul.f32 %v918, %v942
        %v944 = vmin.f32 %v943, 1.0
        %v945 = vmax.f32 %v944, -1.0
        %v946 = vadd.f32 %v665, 1.0
        %v947 = vadd.f32 %v705, 1.0
        %v948 = vadd.f32 %v745, 1.0
        %v949 = vadd.f32 %v785, 1.0
        %v950 = vadd.f32 %v825, 1.0
        %v951 = vadd.f32 %v865, 1.0
        %v952 = vadd.f32 %v905, 1.0
        %v953 = vadd.f32 %v945, 1.0
        %v954 = vmul.f32 %v610, %v946
        %v955 = vmul.f32 %v611, %v947
        %v956 = vmul.f32 %v612, %v948
        %v957 = vmul.f32 %v613, %v949
        %v958 = vmul.f32 %v614, %v950
        %v959 = vmul.f32 %v615, %v951
        %v960 = vmul.f32 %v616, %v952
        %v961 = vmul.f32 %v617, %v953
        %v962 = vpack.c.bf16 %v958, %v954
        %v963 = vpack.c.bf16 %v959, %v955
        %v964 = vpack.c.bf16 %v960, %v956
        %v965 = vpack.c.bf16 %v961, %v957
        %v966 = vld [vmem:[#allocation8] sm:$0xf]
        %v967 = vld [vmem:[#allocation8 + $0x4] sm:$0xf]
        %v968 = vld [vmem:[#allocation8 + $0x8] sm:$0xf]
        %v969 = vld [vmem:[#allocation8 + $0xc] sm:$0xf]
        %v970 = vld [vmem:[#allocation8 + $0x10] sm:$0xf]
        %v971 = vld [vmem:[#allocation8 + $0x14] sm:$0xf]
        %v972 = vld [vmem:[#allocation8 + $0x18] sm:$0xf]
        %v973 = vld [vmem:[#allocation8 + $0x1c] sm:$0xf]
        %v974 = vld [vmem:[#allocation8 + $0x20] sm:$0xf]
        %v975 = vld [vmem:[#allocation8 + $0x24] sm:$0xf]
        %v976 = vld [vmem:[#allocation8 + $0x28] sm:$0xf]
        %v977 = vld [vmem:[#allocation8 + $0x2c] sm:$0xf]
        %v978 = vld [vmem:[#allocation8 + $0x30] sm:$0xf]
        %v979 = vld [vmem:[#allocation8 + $0x34] sm:$0xf]
        %v980 = vld [vmem:[#allocation8 + $0x38] sm:$0xf]
        %v981 = vld [vmem:[#allocation8 + $0x3c] sm:$0xf]
        %v982 = vld [vmem:[#allocation8 + $0x40] sm:$0xf]
        %v983 = vld [vmem:[#allocation8 + $0x44] sm:$0xf]
        %v984 = vld [vmem:[#allocation8 + $0x48] sm:$0xf]
        %v985 = vld [vmem:[#allocation8 + $0x4c] sm:$0xf]
        %v986 = vld [vmem:[#allocation8 + $0x50] sm:$0xf]
        %v987 = vld [vmem:[#allocation8 + $0x54] sm:$0xf]
        %v988 = vld [vmem:[#allocation8 + $0x58] sm:$0xf]
        %v989 = vld [vmem:[#allocation8 + $0x5c] sm:$0xf]
        %v990 = vld [vmem:[#allocation8 + $0x60] sm:$0xf]
        %v991 = vld [vmem:[#allocation8 + $0x64] sm:$0xf]
        %v992 = vld [vmem:[#allocation8 + $0x68] sm:$0xf]
        %v993 = vld [vmem:[#allocation8 + $0x6c] sm:$0xf]
        %v994 = vld [vmem:[#allocation8 + $0x70] sm:$0xf]
        %v995 = vld [vmem:[#allocation8 + $0x74] sm:$0xf]
        %v996 = vld [vmem:[#allocation8 + $0x78] sm:$0xf]
        %v997 = vld [vmem:[#allocation8 + $0x7c] sm:$0xf]
        %v998 = vld [vmem:[#allocation8 + $0x80] sm:$0xf]
        %v999 = vld [vmem:[#allocation8 + $0x84] sm:$0xf]
        %v1000 = vld [vmem:[#allocation8 + $0x88] sm:$0xf]
        %v1001 = vld [vmem:[#allocation8 + $0x8c] sm:$0xf]
        %v1002 = vld [vmem:[#allocation8 + $0x90] sm:$0xf]
        %v1003 = vld [vmem:[#allocation8 + $0x94] sm:$0xf]
        %v1004 = vld [vmem:[#allocation8 + $0x98] sm:$0xf]
        %v1005 = vld [vmem:[#allocation8 + $0x9c] sm:$0xf]
        %v1006 = vld [vmem:[#allocation8 + $0xa0] sm:$0xf]
        %v1007 = vld [vmem:[#allocation8 + $0xa4] sm:$0xf]
        %v1008 = vld [vmem:[#allocation8 + $0xa8] sm:$0xf]
        %v1009 = vld [vmem:[#allocation8 + $0xac] sm:$0xf]
        %v1010 = vld [vmem:[#allocation8 + $0xb0] sm:$0xf]
        %v1011 = vld [vmem:[#allocation8 + $0xb4] sm:$0xf]
        %v1012 = vld [vmem:[#allocation8 + $0xb8] sm:$0xf]
        %v1013 = vld [vmem:[#allocation8 + $0xbc] sm:$0xf]
        %v1014 = vld [vmem:[#allocation8 + $0xc0] sm:$0xf]
        %v1015 = vld [vmem:[#allocation8 + $0xc4] sm:$0xf]
        %v1016 = vld [vmem:[#allocation8 + $0xc8] sm:$0xf]
        %v1017 = vld [vmem:[#allocation8 + $0xcc] sm:$0xf]
        %v1018 = vld [vmem:[#allocation8 + $0xd0] sm:$0xf]
        %v1019 = vld [vmem:[#allocation8 + $0xd4] sm:$0xf]
        %v1020 = vld [vmem:[#allocation8 + $0xd8] sm:$0xf]
        %v1021 = vld [vmem:[#allocation8 + $0xdc] sm:$0xf]
        %v1022 = vld [vmem:[#allocation8 + $0xe0] sm:$0xf]
        %v1023 = vld [vmem:[#allocation8 + $0xe4] sm:$0xf]
        %v1024 = vld [vmem:[#allocation8 + $0xe8] sm:$0xf]
        %v1025 = vld [vmem:[#allocation8 + $0xec] sm:$0xf]
        %v1026 = vld [vmem:[#allocation8 + $0xf0] sm:$0xf]
        %v1027 = vld [vmem:[#allocation8 + $0xf4] sm:$0xf]
        %v1028 = vld [vmem:[#allocation8 + $0xf8] sm:$0xf]
        %v1029 = vld [vmem:[#allocation8 + $0xfc] sm:$0xf]
        %v1030 = vld [vmem:[%s4] sm:$0x1]
        %v1032 = vperm.slane %v1030, 0
        %v1098 = vunpack.c.l.b16 %v966
        %v1099 = vunpack.c.l.b16 %v967
        %v1100 = vunpack.c.l.b16 %v968
        %v1101 = vunpack.c.l.b16 %v969
        %v1102 = vunpack.c.l.b16 %v970
        %v1103 = vunpack.c.l.b16 %v971
        %v1104 = vunpack.c.l.b16 %v972
        %v1105 = vunpack.c.l.b16 %v973
        %v1106 = vunpack.c.l.b16 %v974
        %v1107 = vunpack.c.l.b16 %v975
        %v1108 = vunpack.c.l.b16 %v976
        %v1109 = vunpack.c.l.b16 %v977
        %v1110 = vunpack.c.l.b16 %v978
        %v1111 = vunpack.c.l.b16 %v979
        %v1112 = vunpack.c.l.b16 %v980
        %v1113 = vunpack.c.l.b16 %v981
        %v1114 = vunpack.c.l.b16 %v982
        %v1115 = vunpack.c.l.b16 %v983
        %v1116 = vunpack.c.l.b16 %v984
        %v1117 = vunpack.c.l.b16 %v985
        %v1118 = vunpack.c.l.b16 %v986
        %v1119 = vunpack.c.l.b16 %v987
        %v1120 = vunpack.c.l.b16 %v988
        %v1121 = vunpack.c.l.b16 %v989
        %v1122 = vunpack.c.l.b16 %v990
        %v1123 = vunpack.c.l.b16 %v991
        %v1124 = vunpack.c.l.b16 %v992
        %v1125 = vunpack.c.l.b16 %v993
        %v1126 = vunpack.c.l.b16 %v994
        %v1127 = vunpack.c.l.b16 %v995
        %v1128 = vunpack.c.l.b16 %v996
        %v1129 = vunpack.c.l.b16 %v997
        %v1130 = vunpack.c.l.b16 %v998
        %v1131 = vunpack.c.l.b16 %v999
        %v1132 = vunpack.c.l.b16 %v1000
        %v1133 = vunpack.c.l.b16 %v1001
        %v1134 = vunpack.c.l.b16 %v1002
        %v1135 = vunpack.c.l.b16 %v1003
        %v1136 = vunpack.c.l.b16 %v1004
        %v1137 = vunpack.c.l.b16 %v1005
        %v1138 = vunpack.c.l.b16 %v1006
        %v1139 = vunpack.c.l.b16 %v1007
        %v1140 = vunpack.c.l.b16 %v1008
        %v1141 = vunpack.c.l.b16 %v1009
        %v1142 = vunpack.c.l.b16 %v1010
        %v1143 = vunpack.c.l.b16 %v1011
        %v1144 = vunpack.c.l.b16 %v1012
        %v1145 = vunpack.c.l.b16 %v1013
        %v1146 = vunpack.c.l.b16 %v1014
        %v1147 = vunpack.c.l.b16 %v1015
        %v1148 = vunpack.c.l.b16 %v1016
        %v1149 = vunpack.c.l.b16 %v1017
        %v1150 = vunpack.c.l.b16 %v1018
        %v1151 = vunpack.c.l.b16 %v1019
        %v1152 = vunpack.c.l.b16 %v1020
        %v1153 = vunpack.c.l.b16 %v1021
        %v1154 = vunpack.c.l.b16 %v1022
        %v1155 = vunpack.c.l.b16 %v1023
        %v1156 = vunpack.c.l.b16 %v1024
        %v1157 = vunpack.c.l.b16 %v1025
        %v1158 = vunpack.c.l.b16 %v1026
        %v1159 = vunpack.c.l.b16 %v1027
        %v1160 = vunpack.c.l.b16 %v1028
        %v1161 = vunpack.c.l.b16 %v1029
        %v1162 = vpack.c.b16 %v1099, %v1098
        %v1163 = vpack.c.b16 %v1101, %v1100
        %v1164 = vpack.c.b16 %v1103, %v1102
        %v1165 = vpack.c.b16 %v1105, %v1104
        %v1166 = vpack.c.b16 %v1107, %v1106
        %v1167 = vpack.c.b16 %v1109, %v1108
        %v1168 = vpack.c.b16 %v1111, %v1110
        %v1169 = vpack.c.b16 %v1113, %v1112
        %v1170 = vpack.c.b16 %v1115, %v1114
        %v1171 = vpack.c.b16 %v1117, %v1116
        %v1172 = vpack.c.b16 %v1119, %v1118
        %v1173 = vpack.c.b16 %v1121, %v1120
        %v1174 = vpack.c.b16 %v1123, %v1122
        %v1175 = vpack.c.b16 %v1125, %v1124
        %v1176 = vpack.c.b16 %v1127, %v1126
        %v1177 = vpack.c.b16 %v1129, %v1128
        %v1178 = vpack.c.b16 %v1131, %v1130
        %v1179 = vpack.c.b16 %v1133, %v1132
        %v1180 = vpack.c.b16 %v1135, %v1134
        %v1181 = vpack.c.b16 %v1137, %v1136
        %v1182 = vpack.c.b16 %v1139, %v1138
        %v1183 = vpack.c.b16 %v1141, %v1140
        %v1184 = vpack.c.b16 %v1143, %v1142
        %v1185 = vpack.c.b16 %v1145, %v1144
        %v1186 = vpack.c.b16 %v1147, %v1146
        %v1187 = vpack.c.b16 %v1149, %v1148
        %v1188 = vpack.c.b16 %v1151, %v1150
        %v1189 = vpack.c.b16 %v1153, %v1152
        %v1190 = vpack.c.b16 %v1155, %v1154
        %v1191 = vpack.c.b16 %v1157, %v1156
        %v1192 = vpack.c.b16 %v1159, %v1158
        %v1193 = vpack.c.b16 %v1161, %v1160
        %1226 = vmatpush.bf16.msra.mxu0 %v1169
        %1227 = vmatpush.bf16.msra.mxu0 %v1168
        %1228 = vmatpush.bf16.msra.mxu0 %v1167
        %1229 = vmatpush.bf16.msra.mxu0 %v1166
        %1230 = vmatpush.bf16.msra.mxu0 %v1165
        %1231 = vmatpush.bf16.msra.mxu0 %v1164
        %1232 = vmatpush.bf16.msra.mxu0 %v1163
        %1233 = vmatpush.bf16.msra.mxu0 %v1162
        %1234 = vmatmul.bf16.gmra.mxu0 %v962
        %v1235 = vpop.f32.mrf.mxu0
        %v1236 = vadd.f32 %v1032, %v1235
        %v1237 = vpop.f32.mrf.mxu0
        %v1238 = vadd.f32 %v1032, %v1237
        %1239 = vdwg.mxu0
        %1240 = vmatpush.bf16.msra.mxu0 %v1177
        %1241 = vmatpush.bf16.msra.mxu0 %v1176
        %1242 = vmatpush.bf16.msra.mxu0 %v1175
        %1243 = vmatpush.bf16.msra.mxu0 %v1174
        %1244 = vmatpush.bf16.msra.mxu0 %v1173
        %1245 = vmatpush.bf16.msra.mxu0 %v1172
        %1246 = vmatpush.bf16.msra.mxu0 %v1171
        %1247 = vmatpush.bf16.msra.mxu0 %v1170
        %1248 = vmatmul.bf16.gmra.mxu0 %v963
        %v1249 = vpop.f32.mrf.mxu0
        %v1250 = vadd.f32 %v1236, %v1249
        %v1251 = vpop.f32.mrf.mxu0
        %v1252 = vadd.f32 %v1238, %v1251
        %1253 = vdwg.mxu0
        %1254 = vmatpush.bf16.msra.mxu0 %v1185
        %1255 = vmatpush.bf16.msra.mxu0 %v1184
        %1256 = vmatpush.bf16.msra.mxu0 %v1183
        %1257 = vmatpush.bf16.msra.mxu0 %v1182
        %1258 = vmatpush.bf16.msra.mxu0 %v1181
        %1259 = vmatpush.bf16.msra.mxu0 %v1180
        %1260 = vmatpush.bf16.msra.mxu0 %v1179
        %1261 = vmatpush.bf16.msra.mxu0 %v1178
        %1262 = vmatmul.bf16.gmra.mxu0 %v964
        %v1263 = vpop.f32.mrf.mxu0
        %v1264 = vadd.f32 %v1250, %v1263
        %v1265 = vpop.f32.mrf.mxu0
        %v1266 = vadd.f32 %v1252, %v1265
        %1267 = vdwg.mxu0
        %1268 = vmatpush.bf16.msra.mxu0 %v1193
        %1269 = vmatpush.bf16.msra.mxu0 %v1192
        %1270 = vmatpush.bf16.msra.mxu0 %v1191
        %1271 = vmatpush.bf16.msra.mxu0 %v1190
        %1272 = vmatpush.bf16.msra.mxu0 %v1189
        %1273 = vmatpush.bf16.msra.mxu0 %v1188
        %1274 = vmatpush.bf16.msra.mxu0 %v1187
        %1275 = vmatpush.bf16.msra.mxu0 %v1186
        %1276 = vmatmul.bf16.gmra.mxu0 %v965
        %v1277 = vpop.f32.mrf.mxu0
        %v1278 = vadd.f32 %v1264, %v1277
        %v1279 = vpop.f32.mrf.mxu0
        %v1280 = vadd.f32 %v1266, %v1279
        %1281 = vdwg.mxu0
        %v1282 = vadd.f32 %v1278, %v349
        %v1283 = vadd.f32 %v1280, %v350
        %v1284 = vld [vmem:[%s5] sm:$0x1]
        %v1285 = vld [vmem:[%s6] sm:$0x1]
        %1286 = vadd.xlane.f32.xlu0 %v1282
        %v1287 = vpop.xlane.xlu0 %1286
        %1288 = vadd.xlane.f32.xlu0 %v1283
        %v1289 = vpop.xlane.xlu0 %1288
        %v1290 = vrcp.pop 128.0
        %v1291 = vmul.f32 128.0, %v1290
        %v1292 = vsub.f32 1.0, %v1291
        %v1293 = vmul.f32 %v1290, %v1292
        %v1294 = vadd.f32 %v1290, %v1293
        %vm1295 = vweird.f32 %v1290
        %v1296 = vsel %vm1295, %v1290, %v1294
        %v1297 = vmul.f32 %v1287, %v1296
        %v1298 = vmul.f32 %v1289, %v1296
        %v1299 = vsub.f32 %v1282, %v1297
        %v1300 = vsub.f32 %v1283, %v1298
        %v1301 = vmul.f32 %v1299, %v1299
        %v1302 = vmul.f32 %v1300, %v1300
        %1303 = vadd.xlane.f32.xlu0 %v1301
        %v1304 = vpop.xlane.xlu0 %1303
        %1305 = vadd.xlane.f32.xlu0 %v1302
        %v1306 = vpop.xlane.xlu0 %1305
        %v1307 = vmul.f32 %v1304, 0.007874016
        %v1308 = vmul.f32 %v1306, 0.007874016
        %v1309 = vrsqrt.pop %v1307
        %v1310 = vmul.f32 %v1309, %v1307
        %v1311 = vmul.f32 %v1310, %v1309
        %v1312 = vmul.f32 0.5, %v1311
        %v1313 = vsub.f32 1.5, %v1312
        %v1314 = vmul.f32 %v1309, %v1313
        %v1315 = vmul.f32 %v1307, %v1314
        %vm1316 = vcmp.eq.f32.partialorder %v1307, inf
        %v1317 = vsel %vm1316, %v1307, %v1315
        %vm1318 = vcmp.eq.f32.partialorder %v1307, 0.0
        %v1319 = vand.u32 %v1307, 2147483648
        %v1320 = vsel %vm1318, %v1319, %v1317
        %v1321 = vrsqrt.pop %v1308
        %v1322 = vmul.f32 %v1321, %v1308
        %v1323 = vmul.f32 %v1322, %v1321
        %v1324 = vmul.f32 0.5, %v1323
        %v1325 = vsub.f32 1.5, %v1324
        %v1326 = vmul.f32 %v1321, %v1325
        %v1327 = vmul.f32 %v1308, %v1326
        %vm1328 = vcmp.eq.f32.partialorder %v1308, inf
        %v1329 = vsel %vm1328, %v1308, %v1327
        %vm1330 = vcmp.eq.f32.partialorder %v1308, 0.0
        %v1331 = vand.u32 %v1308, 2147483648
        %v1332 = vsel %vm1330, %v1331, %v1329
        %v1333 = vmax.f32 %v1320, 1e-06
        %v1334 = vmax.f32 %v1332, 1e-06
        %v1335 = vrcp.pop %v1333
        %v1336 = vmul.f32 %v1333, %v1335
        %v1337 = vsub.f32 1.0, %v1336
        %v1338 = vmul.f32 %v1335, %v1337
        %v1339 = vadd.f32 %v1335, %v1338
        %vm1340 = vweird.f32 %v1333
        %vm1341 = vweird.f32 %v1335
        %vm1342 = vmor %vm1340, %vm1341
        %v1343 = vsel %vm1342, %v1335, %v1339
        %v1344 = vand.u32 2147483647, %v1333
        %vm1345 = vcmp.eq.f32.partialorder %v1344, 8.507059e+37
        %v1346 = vand.u32 %v1333, 2147483648
        %v1347 = vor.u32 1.1754944e-38, %v1346
        %v1348 = vsel %vm1345, %v1347, %v1343
        %v1349 = vmul.f32 %v1299, %v1348
        %v1350 = vrcp.pop %v1334
        %v1351 = vmul.f32 %v1334, %v1350
        %v1352 = vsub.f32 1.0, %v1351
        %v1353 = vmul.f32 %v1350, %v1352
        %v1354 = vadd.f32 %v1350, %v1353
        %vm1355 = vweird.f32 %v1334
        %vm1356 = vweird.f32 %v1350
        %vm1357 = vmor %vm1355, %vm1356
        %v1358 = vsel %vm1357, %v1350, %v1354
        %v1359 = vand.u32 2147483647, %v1334
        %vm1360 = vcmp.eq.f32.partialorder %v1359, 8.507059e+37
        %v1361 = vand.u32 %v1334, 2147483648
        %v1362 = vor.u32 1.1754944e-38, %v1361
        %v1363 = vsel %vm1360, %v1362, %v1358
        %v1364 = vmul.f32 %v1300, %v1363
        %v1366 = vperm.slane %v1284, 0
        %v1368 = vmul.f32 %v1349, %v1366
        %v1369 = vmul.f32 %v1364, %v1366
        %v1371 = vperm.slane %v1285, 0
        %v1373 = vadd.f32 %v1368, %v1371
        %v1374 = vadd.f32 %v1369, %v1371
        %1375 = vst [vmem:[%s346] sm:$0xff] %v1373
        %1376 = vst [vmem:[%s346 + $0x8] sm:$0xff] %v1374
        %s1377 = sand.u32 %s186, 1
        %s1378 = scalar_lea.sflag [#allocation4], %s1377
        %s1379 = sand.u32 %s186, 1
        %s1380 = smul.addr %s1379, 16
        %s1381 = scalar_lea.vmem [#allocation10], %s1380
        // Predicated region
        $region65: #{tpu_custom_call.1} parent=47 // pred_check
          %p1382 = pneg %p196
        $region66: #{tpu_custom_call.1} parent=47 // pred_check_branch
          %1384 = sbr.rel (%p1382) target = $region68
        $region67: #{tpu_custom_call.1} parent=47 // pred_region
          %s1385 = smul.u32 2, %s26
          %1387 = vsyncadd %s1378, 0
          %s1388 = smul.addr %s1385, 8
          %s1389 = scalar_lea.hbm %s7, %s1388
          %s1390 = sshll.u32 %s1381, 4
          %s1391 = int_to_ptr.vmem [resolvable:$true] %s1390
          %s1392 = sshll.u32 %s1389, 4
          %s1393 = int_to_ptr.hbm [resolvable:$true] %s1392
          %1398 = dma.vmem_to_hbm [thread:$0]  %s1391, 256, %s1393, %s1378, 128, 128, 8
        $region68: #{tpu_custom_call.1} parent=47 // pred_fallthru
          _
      $region48: #{tpu_custom_call.1} parent=5 // pred_fallthru
        _
      %p1399 = scmp.le.s32.totalorder 2, %s21
      // Predicated region
      $region69: #{tpu_custom_call.1} parent=5 // pred_check
        %p1400 = pneg %p1399
      $region70: #{tpu_custom_call.1} parent=5 // pred_check_branch
        %1402 = sbr.rel (%p1400) target = $region72
      $region71: #{tpu_custom_call.1} parent=5 // pred_region
        %s1403 = ssub.s32 %s21, 2
        // Predicated region
        $region73: #{tpu_custom_call.1} parent=71 // pred_check
          %p1404 = pneg %p202
        $region74: #{tpu_custom_call.1} parent=71 // pred_check_branch
          %1406 = sbr.rel (%p1404) target = $region76
        $region75: #{tpu_custom_call.1} parent=71 // pred_region
          %s1407 = sand.u32 %s187, 1
          %s1408 = scalar_lea.sflag [#allocation4], %s1407
          %s1409 = sand.u32 %s187, 1
          %s1410 = smul.addr %s1409, 16
          %s1411 = scalar_lea.vmem [#allocation10], %s1410
          %1413 = dma.done %s1408, 256
        $region76: #{tpu_custom_call.1} parent=71 // pred_fallthru
          _
      $region72: #{tpu_custom_call.1} parent=5 // pred_fallthru
        _
    $region6: #{tpu_custom_call.1} parent=1 // loop_footer
      %s25 = sadd.s32 1, %s21
    $region7: #{tpu_custom_call.1} parent=1 // loop_footer_branch
      %20 = sbr.rel target = $region3
    $region8: #{tpu_custom_call.1} parent=1 // loop_exit
      _
    %1414 = vsyncpa [#allocation3], 1
    %s1415 = scalar_lea.sflag [#allocation3], 1
    %1416 = vsyncpa %s1415, 1
    %1417 = vsyncpa [#allocation6], 1
    %1418 = vsyncpa [#allocation9], 1
    %1419 = vsyncpa [#allocation4], 1
    %s1420 = scalar_lea.sflag [#allocation4], 1
    %1421 = vsyncpa %s1420, 1

</llo_original>
